<compile_context>
chip_gen: v7x
topology: tpu7x:2x2x1
jax: 0.10.0
libtpu: 0.0.40
codegen_flags: <defaults>
</compile_context>

<pallas_src>
import functools

import jax
import jax.numpy as jnp
from jax.experimental import pallas as pl
from jax.experimental.pallas import tpu as pltpu


# ------------------------------ fused kernel --------------------------------
def _cross_attention_kernel(q_ref, k_ref, v_ref,
                            wq_ref, bq_ref, wk_ref, bk_ref,
                            wv_ref, bv_ref, wo_ref, bo_ref,
                            gamma_ref, beta_ref,
                            out_ref, aw_ref,
                            *, num_heads, head_dim, eps):
    # One batch element per grid step.
    q = q_ref[0].astype(jnp.float32)   # (Sq, E)
    k = k_ref[0].astype(jnp.float32)   # (Sk, E)
    v = v_ref[0].astype(jnp.float32)   # (Sk, E)

    # Input projections (x @ W + b), f32 accumulation on the MXU.
    q1 = jnp.dot(q, wq_ref[...], preferred_element_type=jnp.float32) + bq_ref[...]
    k1 = jnp.dot(k, wk_ref[...], preferred_element_type=jnp.float32) + bk_ref[...]
    v1 = jnp.dot(v, wv_ref[...], preferred_element_type=jnp.float32) + bv_ref[...]

    scale = 1.0 / (head_dim ** 0.5)

    head_outs = []
    for h in range(num_heads):                       # static unrolled head loop
        sl = slice(h * head_dim, (h + 1) * head_dim)  # static column slice (free)
        qh = q1[:, sl]                               # (Sq, Dh)
        kh = k1[:, sl]                               # (Sk, Dh)
        vh = v1[:, sl]                               # (Sk, Dh)

        # scores = qh @ kh^T / sqrt(Dh)   (contraction on last dims, MXU-native)
        s = jax.lax.dot_general(qh, kh, (((1,), (1,)), ((), ())),
                                preferred_element_type=jnp.float32) * scale
        # TODO(synk): optional attention mask (masked_fill) not implemented;
        # only the mask=None path of the reference forward is covered.

        # softmax over keys.
        s = s - jnp.max(s, axis=-1, keepdims=True)
        p = jnp.exp(s)
        p = p / jnp.sum(p, axis=-1, keepdims=True)

        aw_ref[0, h] = p.astype(aw_ref.dtype)        # (Sq, Sk) attention weights
        head_outs.append(jnp.dot(p, vh, preferred_element_type=jnp.float32))

    att = jnp.concatenate(head_outs, axis=-1)        # (Sq, E) == transpose+view

    # TODO(synk): nn.Dropout(0.5) applied as identity (inference semantics).
    # Residual + LayerNorm over the embedding dim.
    x = att + q
    mu = jnp.mean(x, axis=-1, keepdims=True)
    var = jnp.mean((x - mu) ** 2, axis=-1, keepdims=True)
    xn = (x - mu) * jax.lax.rsqrt(var + eps)
    y = xn * gamma_ref[...] + beta_ref[...]

    # Output projection W_o.
    out = jnp.dot(y, wo_ref[...], preferred_element_type=jnp.float32) + bo_ref[...]
    out_ref[0] = out.astype(out_ref.dtype)


# ------------------------------ wrapper --------------------------------------
def cross_attention(query, key, value, params, *, num_heads):
    B, Sq, E = query.shape
    _, Sk, _ = key.shape
    head_dim = E // num_heads

    kernel = functools.partial(_cross_attention_kernel,
                               num_heads=num_heads, head_dim=head_dim, eps=1e-5)

    wspec = pl.BlockSpec((E, E), lambda b: (0, 0))
    bspec = pl.BlockSpec((1, E), lambda b: (0, 0))

    out_shapes = (jax.ShapeDtypeStruct((B, Sq, E), jnp.float32),
                  jax.ShapeDtypeStruct((B, num_heads, Sq, Sk), jnp.float32))

    grid_spec = pltpu.PrefetchScalarGridSpec(
        num_scalar_prefetch=0,
        grid=(B,),
        in_specs=[
            pl.BlockSpec((1, Sq, E), lambda b: (b, 0, 0)),   # query
            pl.BlockSpec((1, Sk, E), lambda b: (b, 0, 0)),   # key
            pl.BlockSpec((1, Sk, E), lambda b: (b, 0, 0)),   # value
            wspec, bspec,   # W_q, b_q
            wspec, bspec,   # W_k, b_k
            wspec, bspec,   # W_v, b_v
            wspec, bspec,   # W_o, b_o
            bspec, bspec,   # layernorm gamma, beta
        ],
        out_specs=[
            pl.BlockSpec((1, Sq, E), lambda b: (b, 0, 0)),
            pl.BlockSpec((1, num_heads, Sq, Sk), lambda b: (b, 0, 0, 0)),
        ],
    )

    return pl.pallas_call(
        kernel,
        out_shape=out_shapes,
        grid_spec=grid_spec,
        compiler_params=pltpu.CompilerParams(
            dimension_semantics=("parallel",)),   # batch is independent
    )(query, key, value,
      params["wq"], params["bq"], params["wk"], params["bk"],
      params["wv"], params["bv"], params["wo"], params["bo"],
      params["gamma"], params["beta"])


def cross_attention_forward(query, key, value, params, *, num_heads,
                            num_cross_attention):
    """Mirrors CrossAttentionCuston.forward (mask=None)."""
    cross_att_1, attention_weights_1 = cross_attention(
        query, key, value, params, num_heads=num_heads)
    if num_cross_attention == 1:
        return cross_att_1, attention_weights_1, 'weights'


# ------------------------------ parameters -----------------------------------
def init_params(key, embed_dim):
    ks = jax.random.split(key, 8)
    bound = 1.0 / (embed_dim ** 0.5)   # PyTorch nn.Linear default init range

    def u(kk, shape):
        return jax.random.uniform(kk, shape, jnp.float32, -bound, bound)

    return {
        # weights stored (in_features, out_features) so kernels compute x @ W
        "wq": u(ks[0], (embed_dim, embed_dim)), "bq": u(ks[1], (1, embed_dim)),
        "wk": u(ks[2], (embed_dim, embed_dim)), "bk": u(ks[3], (1, embed_dim)),
        "wv": u(ks[4], (embed_dim, embed_dim)), "bv": u(ks[5], (1, embed_dim)),
        "wo": u(ks[6], (embed_dim, embed_dim)), "bo": u(ks[7], (1, embed_dim)),
        "gamma": jnp.ones((1, embed_dim), jnp.float32),   # LayerNorm defaults
        "beta": jnp.zeros((1, embed_dim), jnp.float32),
    }


# ------------------------------ pure-JAX reference ---------------------------
def _reference(query, key, value, params, num_heads):
    B, Sq, E = query.shape
    Sk = key.shape[1]
    Dh = E // num_heads
    hp = jax.lax.Precision.HIGHEST

    q1 = jnp.einsum('bse,ef->bsf', query, params["wq"], precision=hp) + params["bq"][0]
    k1 = jnp.einsum('bse,ef->bsf', key, params["wk"], precision=hp) + params["bk"][0]
    v1 = jnp.einsum('bse,ef->bsf', value, params["wv"], precision=hp) + params["bv"][0]

    qh = q1.reshape(B, Sq, num_heads, Dh).transpose(0, 2, 1, 3)
    kh = k1.reshape(B, Sk, num_heads, Dh).transpose(0, 2, 1, 3)
    vh = v1.reshape(B, Sk, num_heads, Dh).transpose(0, 2, 1, 3)

    scores = jnp.einsum('bhqd,bhkd->bhqk', qh, kh, precision=hp) / (Dh ** 0.5)
    aw = jax.nn.softmax(scores, axis=-1)
    att = jnp.einsum('bhqk,bhkd->bhqd', aw, vh, precision=hp)
    att = att.transpose(0, 2, 1, 3).reshape(B, Sq, E)

    x = att + query
    mu = x.mean(-1, keepdims=True)
    var = ((x - mu) ** 2).mean(-1, keepdims=True)
    xn = (x - mu) / jnp.sqrt(var + 1e-5)
    y = xn * params["gamma"][0] + params["beta"][0]
    out = jnp.einsum('bse,ef->bsf', y, params["wo"], precision=hp) + params["bo"][0]
    return out, aw


# ------------------------------ demo ------------------------------------------
if __name__ == "__main__":
    embed_dim, num_heads, num_cross_attention = 32, 4, 1
    B, Sq, Sk = 2, 8, 16

    key = jax.random.PRNGKey(0)
    kp, kq, kk, kv = jax.random.split(key, 4)
    params = init_params(kp, embed_dim)
    query = jax.random.normal(kq, (B, Sq, embed_dim), jnp.float32)
    key_in = jax.random.normal(kk, (B, Sk, embed_dim), jnp.float32)
    value = jax.random.normal(kv, (B, Sk, embed_dim), jnp.float32)

    cross_att, attn_w, tag = cross_attention_forward(
        query, key_in, value, params,
        num_heads=num_heads, num_cross_attention=num_cross_attention)
    jax.block_until_ready((cross_att, attn_w))

    assert cross_att.shape == (B, Sq, embed_dim)
    assert attn_w.shape == (B, num_heads, Sq, Sk)
    assert tag == 'weights'

    ref_out, ref_aw = _reference(query, key_in, value, params, num_heads)
    assert jnp.allclose(cross_att, ref_out, rtol=1e-2, atol=1e-2)
    assert jnp.allclose(attn_w, ref_aw, rtol=1e-2, atol=1e-2)

    print("KERNEL_OK")
</pallas_src>

<mosaic_0001>
module attributes {stable_mosaic.version = 11 : i64} {
  func.func @_cross_attention_kernel(%arg0: i32, %arg1: memref<1x8x32xf32, #tpu.memory_space<vmem>>, %arg2: memref<1x16x32xf32, #tpu.memory_space<vmem>>, %arg3: memref<1x16x32xf32, #tpu.memory_space<vmem>>, %arg4: memref<32x32xf32, #tpu.memory_space<vmem>>, %arg5: memref<1x32xf32, #tpu.memory_space<vmem>>, %arg6: memref<32x32xf32, #tpu.memory_space<vmem>>, %arg7: memref<1x32xf32, #tpu.memory_space<vmem>>, %arg8: memref<32x32xf32, #tpu.memory_space<vmem>>, %arg9: memref<1x32xf32, #tpu.memory_space<vmem>>, %arg10: memref<32x32xf32, #tpu.memory_space<vmem>>, %arg11: memref<1x32xf32, #tpu.memory_space<vmem>>, %arg12: memref<1x32xf32, #tpu.memory_space<vmem>>, %arg13: memref<1x32xf32, #tpu.memory_space<vmem>>, %arg14: memref<1x8x32xf32, #tpu.memory_space<vmem>>, %arg15: memref<1x4x8x16xf32, #tpu.memory_space<vmem>>) attributes {dimension_semantics = [#tpu.dimension_semantics<parallel>], iteration_bounds = array<i64: 2>, scalar_prefetch = 0 : i64, scratch_operands = 0 : i64, tpu.core_type = #tpu.core_type<tc>, window_params = [{transform_indices = @transform_0, window_bounds = array<i64: 1, 8, 32>}, {transform_indices = @transform_1, window_bounds = array<i64: 1, 16, 32>}, {transform_indices = @transform_2, window_bounds = array<i64: 1, 16, 32>}, {pipeline_mode = #tpu.pipeline_mode<synchronous>, transform_indices = @transform_3, window_bounds = array<i64: 32, 32>}, {pipeline_mode = #tpu.pipeline_mode<synchronous>, transform_indices = @transform_4, window_bounds = array<i64: 1, 32>}, {pipeline_mode = #tpu.pipeline_mode<synchronous>, transform_indices = @transform_5, window_bounds = array<i64: 32, 32>}, {pipeline_mode = #tpu.pipeline_mode<synchronous>, transform_indices = @transform_6, window_bounds = array<i64: 1, 32>}, {pipeline_mode = #tpu.pipeline_mode<synchronous>, transform_indices = @transform_7, window_bounds = array<i64: 32, 32>}, {pipeline_mode = #tpu.pipeline_mode<synchronous>, transform_indices = @transform_8, window_bounds = array<i64: 1, 32>}, {pipeline_mode = #tpu.pipeline_mode<synchronous>, transform_indices = @transform_9, window_bounds = array<i64: 32, 32>}, {pipeline_mode = #tpu.pipeline_mode<synchronous>, transform_indices = @transform_10, window_bounds = array<i64: 1, 32>}, {pipeline_mode = #tpu.pipeline_mode<synchronous>, transform_indices = @transform_11, window_bounds = array<i64: 1, 32>}, {pipeline_mode = #tpu.pipeline_mode<synchronous>, transform_indices = @transform_12, window_bounds = array<i64: 1, 32>}, {transform_indices = @transform_13, window_bounds = array<i64: 1, 8, 32>}, {transform_indices = @transform_14, window_bounds = array<i64: 1, 4, 8, 16>}]} {
    %c0 = arith.constant 0 : index
    %c0_0 = arith.constant 0 : index
    %c0_1 = arith.constant 0 : index
    %0 = vector.load %arg1[%c0, %c0_0, %c0_1] : memref<1x8x32xf32, #tpu.memory_space<vmem>>, vector<1x8x32xf32>
    %1 = vector.shape_cast %0 : vector<1x8x32xf32> to vector<8x32xf32>
    %c0_2 = arith.constant 0 : index
    %c0_3 = arith.constant 0 : index
    %c0_4 = arith.constant 0 : index
    %2 = vector.load %arg2[%c0_2, %c0_3, %c0_4] : memref<1x16x32xf32, #tpu.memory_space<vmem>>, vector<1x16x32xf32>
    %3 = vector.shape_cast %2 : vector<1x16x32xf32> to vector<16x32xf32>
    %c0_5 = arith.constant 0 : index
    %c0_6 = arith.constant 0 : index
    %c0_7 = arith.constant 0 : index
    %4 = vector.load %arg3[%c0_5, %c0_6, %c0_7] : memref<1x16x32xf32, #tpu.memory_space<vmem>>, vector<1x16x32xf32>
    %5 = vector.shape_cast %4 : vector<1x16x32xf32> to vector<16x32xf32>
    %c0_8 = arith.constant 0 : index
    %c0_9 = arith.constant 0 : index
    %6 = vector.load %arg4[%c0_8, %c0_9] : memref<32x32xf32, #tpu.memory_space<vmem>>, vector<32x32xf32>
    %cst = arith.constant dense<0.000000e+00> : vector<8x32xf32>
    %7 = tpu.matmul %1, %6, %cst {dimension_numbers = #tpu.dot_dimension_numbers<[1], [0], [0], [1], [0, 0, 1, 1], [], []>} : vector<8x32xf32>, vector<32x32xf32>, vector<8x32xf32> -> vector<8x32xf32>
    %c0_10 = arith.constant 0 : index
    %c0_11 = arith.constant 0 : index
    %8 = vector.load %arg5[%c0_10, %c0_11] : memref<1x32xf32, #tpu.memory_space<vmem>>, vector<1x32xf32>
    %9 = vector.broadcast %8 : vector<1x32xf32> to vector<8x32xf32>
    %10 = arith.addf %7, %9 : vector<8x32xf32>
    %c0_12 = arith.constant 0 : index
    %c0_13 = arith.constant 0 : index
    %11 = vector.load %arg6[%c0_12, %c0_13] : memref<32x32xf32, #tpu.memory_space<vmem>>, vector<32x32xf32>
    %cst_14 = arith.constant dense<0.000000e+00> : vector<16x32xf32>
    %12 = tpu.matmul %3, %11, %cst_14 {dimension_numbers = #tpu.dot_dimension_numbers<[1], [0], [0], [1], [0, 0, 1, 1], [], []>} : vector<16x32xf32>, vector<32x32xf32>, vector<16x32xf32> -> vector<16x32xf32>
    %c0_15 = arith.constant 0 : index
    %c0_16 = arith.constant 0 : index
    %13 = vector.load %arg7[%c0_15, %c0_16] : memref<1x32xf32, #tpu.memory_space<vmem>>, vector<1x32xf32>
    %14 = vector.broadcast %13 : vector<1x32xf32> to vector<16x32xf32>
    %15 = arith.addf %12, %14 : vector<16x32xf32>
    %c0_17 = arith.constant 0 : index
    %c0_18 = arith.constant 0 : index
    %16 = vector.load %arg8[%c0_17, %c0_18] : memref<32x32xf32, #tpu.memory_space<vmem>>, vector<32x32xf32>
    %cst_19 = arith.constant dense<0.000000e+00> : vector<16x32xf32>
    %17 = tpu.matmul %5, %16, %cst_19 {dimension_numbers = #tpu.dot_dimension_numbers<[1], [0], [0], [1], [0, 0, 1, 1], [], []>} : vector<16x32xf32>, vector<32x32xf32>, vector<16x32xf32> -> vector<16x32xf32>
    %c0_20 = arith.constant 0 : index
    %c0_21 = arith.constant 0 : index
    %18 = vector.load %arg9[%c0_20, %c0_21] : memref<1x32xf32, #tpu.memory_space<vmem>>, vector<1x32xf32>
    %19 = vector.broadcast %18 : vector<1x32xf32> to vector<16x32xf32>
    %20 = arith.addf %17, %19 : vector<16x32xf32>
    %21 = vector.extract_strided_slice %10 {offsets = [0, 0], sizes = [8, 8], strides = [1, 1]} : vector<8x32xf32> to vector<8x8xf32>
    %22 = vector.extract_strided_slice %15 {offsets = [0, 0], sizes = [16, 8], strides = [1, 1]} : vector<16x32xf32> to vector<16x8xf32>
    %23 = vector.extract_strided_slice %20 {offsets = [0, 0], sizes = [16, 8], strides = [1, 1]} : vector<16x32xf32> to vector<16x8xf32>
    %cst_22 = arith.constant dense<0.000000e+00> : vector<8x16xf32>
    %24 = tpu.matmul %21, %22, %cst_22 {dimension_numbers = #tpu.dot_dimension_numbers<[1], [1], [0], [0], [0, 0, 1, 0], [], []>} : vector<8x8xf32>, vector<16x8xf32>, vector<8x16xf32> -> vector<8x16xf32>
    %cst_23 = arith.constant 0.353553385 : f32
    %25 = vector.broadcast %cst_23 : f32 to vector<8x16xf32>
    %26 = arith.mulf %24, %25 : vector<8x16xf32>
    %cst_24 = arith.constant dense<0xFF800000> : vector<8xf32>
    %27 = vector.multi_reduction <maximumf>, %26, %cst_24 [1] : vector<8x16xf32> to vector<8xf32>
    %28 = vector.shape_cast %27 : vector<8xf32> to vector<8x1xf32>
    %29 = vector.broadcast %28 : vector<8x1xf32> to vector<8x16xf32>
    %30 = arith.subf %26, %29 : vector<8x16xf32>
    %31 = math.exp %30 : vector<8x16xf32>
    %cst_25 = arith.constant dense<0.000000e+00> : vector<8xf32>
    %32 = vector.multi_reduction <add>, %31, %cst_25 [1] : vector<8x16xf32> to vector<8xf32>
    %33 = vector.shape_cast %32 : vector<8xf32> to vector<8x1xf32>
    %34 = vector.broadcast %33 : vector<8x1xf32> to vector<8x16xf32>
    %35 = arith.divf %31, %34 : vector<8x16xf32>
    %c0_26 = arith.constant 0 : index
    %c0_27 = arith.constant 0 : index
    %c0_28 = arith.constant 0 : index
    %c0_29 = arith.constant 0 : index
    %36 = vector.load %arg15[%c0_26, %c0_27, %c0_28, %c0_29] : memref<1x4x8x16xf32, #tpu.memory_space<vmem>>, vector<1x1x8x16xf32>
    %37 = vector.shape_cast %36 : vector<1x1x8x16xf32> to vector<8x16xf32>
    %38 = vector.shape_cast %35 : vector<8x16xf32> to vector<1x1x8x16xf32>
    tpu.vector_store %arg15[%c0_26, %c0_27, %c0_28, %c0_29], %38 {strides = array<i32>} : memref<1x4x8x16xf32, #tpu.memory_space<vmem>>, vector<1x1x8x16xf32>,
    %cst_30 = arith.constant dense<0.000000e+00> : vector<8x8xf32>
    %39 = tpu.matmul %35, %23, %cst_30 {dimension_numbers = #tpu.dot_dimension_numbers<[1], [0], [0], [1], [0, 0, 1, 1], [], []>} : vector<8x16xf32>, vector<16x8xf32>, vector<8x8xf32> -> vector<8x8xf32>
    %40 = vector.extract_strided_slice %10 {offsets = [0, 8], sizes = [8, 8], strides = [1, 1]} : vector<8x32xf32> to vector<8x8xf32>
    %41 = vector.extract_strided_slice %15 {offsets = [0, 8], sizes = [16, 8], strides = [1, 1]} : vector<16x32xf32> to vector<16x8xf32>
    %42 = vector.extract_strided_slice %20 {offsets = [0, 8], sizes = [16, 8], strides = [1, 1]} : vector<16x32xf32> to vector<16x8xf32>
    %cst_31 = arith.constant dense<0.000000e+00> : vector<8x16xf32>
    %43 = tpu.matmul %40, %41, %cst_31 {dimension_numbers = #tpu.dot_dimension_numbers<[1], [1], [0], [0], [0, 0, 1, 0], [], []>} : vector<8x8xf32>, vector<16x8xf32>, vector<8x16xf32> -> vector<8x16xf32>
    %cst_32 = arith.constant 0.353553385 : f32
    %44 = vector.broadcast %cst_32 : f32 to vector<8x16xf32>
    %45 = arith.mulf %43, %44 : vector<8x16xf32>
    %cst_33 = arith.constant dense<0xFF800000> : vector<8xf32>
    %46 = vector.multi_reduction <maximumf>, %45, %cst_33 [1] : vector<8x16xf32> to vector<8xf32>
    %47 = vector.shape_cast %46 : vector<8xf32> to vector<8x1xf32>
    %48 = vector.broadcast %47 : vector<8x1xf32> to vector<8x16xf32>
    %49 = arith.subf %45, %48 : vector<8x16xf32>
    %50 = math.exp %49 : vector<8x16xf32>
    %cst_34 = arith.constant dense<0.000000e+00> : vector<8xf32>
    %51 = vector.multi_reduction <add>, %50, %cst_34 [1] : vector<8x16xf32> to vector<8xf32>
    %52 = vector.shape_cast %51 : vector<8xf32> to vector<8x1xf32>
    %53 = vector.broadcast %52 : vector<8x1xf32> to vector<8x16xf32>
    %54 = arith.divf %50, %53 : vector<8x16xf32>
    %c0_35 = arith.constant 0 : index
    %c1 = arith.constant 1 : index
    %c0_36 = arith.constant 0 : index
    %c0_37 = arith.constant 0 : index
    %55 = vector.load %arg15[%c0_35, %c1, %c0_36, %c0_37] : memref<1x4x8x16xf32, #tpu.memory_space<vmem>>, vector<1x1x8x16xf32>
    %56 = vector.shape_cast %55 : vector<1x1x8x16xf32> to vector<8x16xf32>
    %57 = vector.shape_cast %54 : vector<8x16xf32> to vector<1x1x8x16xf32>
    tpu.vector_store %arg15[%c0_35, %c1, %c0_36, %c0_37], %57 {strides = array<i32>} : memref<1x4x8x16xf32, #tpu.memory_space<vmem>>, vector<1x1x8x16xf32>,
    %cst_38 = arith.constant dense<0.000000e+00> : vector<8x8xf32>
    %58 = tpu.matmul %54, %42, %cst_38 {dimension_numbers = #tpu.dot_dimension_numbers<[1], [0], [0], [1], [0, 0, 1, 1], [], []>} : vector<8x16xf32>, vector<16x8xf32>, vector<8x8xf32> -> vector<8x8xf32>
    %59 = vector.extract_strided_slice %10 {offsets = [0, 16], sizes = [8, 8], strides = [1, 1]} : vector<8x32xf32> to vector<8x8xf32>
    %60 = vector.extract_strided_slice %15 {offsets = [0, 16], sizes = [16, 8], strides = [1, 1]} : vector<16x32xf32> to vector<16x8xf32>
    %61 = vector.extract_strided_slice %20 {offsets = [0, 16], sizes = [16, 8], strides = [1, 1]} : vector<16x32xf32> to vector<16x8xf32>
    %cst_39 = arith.constant dense<0.000000e+00> : vector<8x16xf32>
    %62 = tpu.matmul %59, %60, %cst_39 {dimension_numbers = #tpu.dot_dimension_numbers<[1], [1], [0], [0], [0, 0, 1, 0], [], []>} : vector<8x8xf32>, vector<16x8xf32>, vector<8x16xf32> -> vector<8x16xf32>
    %cst_40 = arith.constant 0.353553385 : f32
    %63 = vector.broadcast %cst_40 : f32 to vector<8x16xf32>
    %64 = arith.mulf %62, %63 : vector<8x16xf32>
    %cst_41 = arith.constant dense<0xFF800000> : vector<8xf32>
    %65 = vector.multi_reduction <maximumf>, %64, %cst_41 [1] : vector<8x16xf32> to vector<8xf32>
    %66 = vector.shape_cast %65 : vector<8xf32> to vector<8x1xf32>
    %67 = vector.broadcast %66 : vector<8x1xf32> to vector<8x16xf32>
    %68 = arith.subf %64, %67 : vector<8x16xf32>
    %69 = math.exp %68 : vector<8x16xf32>
    %cst_42 = arith.constant dense<0.000000e+00> : vector<8xf32>
    %70 = vector.multi_reduction <add>, %69, %cst_42 [1] : vector<8x16xf32> to vector<8xf32>
    %71 = vector.shape_cast %70 : vector<8xf32> to vector<8x1xf32>
    %72 = vector.broadcast %71 : vector<8x1xf32> to vector<8x16xf32>
    %73 = arith.divf %69, %72 : vector<8x16xf32>
    %c0_43 = arith.constant 0 : index
    %c2 = arith.constant 2 : index
    %c0_44 = arith.constant 0 : index
    %c0_45 = arith.constant 0 : index
    %74 = vector.load %arg15[%c0_43, %c2, %c0_44, %c0_45] : memref<1x4x8x16xf32, #tpu.memory_space<vmem>>, vector<1x1x8x16xf32>
    %75 = vector.shape_cast %74 : vector<1x1x8x16xf32> to vector<8x16xf32>
    %76 = vector.shape_cast %73 : vector<8x16xf32> to vector<1x1x8x16xf32>
    tpu.vector_store %arg15[%c0_43, %c2, %c0_44, %c0_45], %76 {strides = array<i32>} : memref<1x4x8x16xf32, #tpu.memory_space<vmem>>, vector<1x1x8x16xf32>,
    %cst_46 = arith.constant dense<0.000000e+00> : vector<8x8xf32>
    %77 = tpu.matmul %73, %61, %cst_46 {dimension_numbers = #tpu.dot_dimension_numbers<[1], [0], [0], [1], [0, 0, 1, 1], [], []>} : vector<8x16xf32>, vector<16x8xf32>, vector<8x8xf32> -> vector<8x8xf32>
    %78 = vector.extract_strided_slice %10 {offsets = [0, 24], sizes = [8, 8], strides = [1, 1]} : vector<8x32xf32> to vector<8x8xf32>
    %79 = vector.extract_strided_slice %15 {offsets = [0, 24], sizes = [16, 8], strides = [1, 1]} : vector<16x32xf32> to vector<16x8xf32>
    %80 = vector.extract_strided_slice %20 {offsets = [0, 24], sizes = [16, 8], strides = [1, 1]} : vector<16x32xf32> to vector<16x8xf32>
    %cst_47 = arith.constant dense<0.000000e+00> : vector<8x16xf32>
    %81 = tpu.matmul %78, %79, %cst_47 {dimension_numbers = #tpu.dot_dimension_numbers<[1], [1], [0], [0], [0, 0, 1, 0], [], []>} : vector<8x8xf32>, vector<16x8xf32>, vector<8x16xf32> -> vector<8x16xf32>
    %cst_48 = arith.constant 0.353553385 : f32
    %82 = vector.broadcast %cst_48 : f32 to vector<8x16xf32>
    %83 = arith.mulf %81, %82 : vector<8x16xf32>
    %cst_49 = arith.constant dense<0xFF800000> : vector<8xf32>
    %84 = vector.multi_reduction <maximumf>, %83, %cst_49 [1] : vector<8x16xf32> to vector<8xf32>
    %85 = vector.shape_cast %84 : vector<8xf32> to vector<8x1xf32>
    %86 = vector.broadcast %85 : vector<8x1xf32> to vector<8x16xf32>
    %87 = arith.subf %83, %86 : vector<8x16xf32>
    %88 = math.exp %87 : vector<8x16xf32>
    %cst_50 = arith.constant dense<0.000000e+00> : vector<8xf32>
    %89 = vector.multi_reduction <add>, %88, %cst_50 [1] : vector<8x16xf32> to vector<8xf32>
    %90 = vector.shape_cast %89 : vector<8xf32> to vector<8x1xf32>
    %91 = vector.broadcast %90 : vector<8x1xf32> to vector<8x16xf32>
    %92 = arith.divf %88, %91 : vector<8x16xf32>
    %c0_51 = arith.constant 0 : index
    %c3 = arith.constant 3 : index
    %c0_52 = arith.constant 0 : index
    %c0_53 = arith.constant 0 : index
    %93 = vector.load %arg15[%c0_51, %c3, %c0_52, %c0_53] : memref<1x4x8x16xf32, #tpu.memory_space<vmem>>, vector<1x1x8x16xf32>
    %94 = vector.shape_cast %93 : vector<1x1x8x16xf32> to vector<8x16xf32>
    %95 = vector.shape_cast %92 : vector<8x16xf32> to vector<1x1x8x16xf32>
    tpu.vector_store %arg15[%c0_51, %c3, %c0_52, %c0_53], %95 {strides = array<i32>} : memref<1x4x8x16xf32, #tpu.memory_space<vmem>>, vector<1x1x8x16xf32>,
    %cst_54 = arith.constant dense<0.000000e+00> : vector<8x8xf32>
    %96 = tpu.matmul %92, %80, %cst_54 {dimension_numbers = #tpu.dot_dimension_numbers<[1], [0], [0], [1], [0, 0, 1, 1], [], []>} : vector<8x16xf32>, vector<16x8xf32>, vector<8x8xf32> -> vector<8x8xf32>
    %97 = tpu.concatenate %39, %58, %77, %96 in 1 : vector<8x8xf32>, vector<8x8xf32>, vector<8x8xf32>, vector<8x8xf32> -> vector<8x32xf32>
    %98 = arith.addf %97, %1 : vector<8x32xf32>
    %cst_55 = arith.constant dense<0.000000e+00> : vector<8xf32>
    %99 = vector.multi_reduction <add>, %98, %cst_55 [1] : vector<8x32xf32> to vector<8xf32>
    %100 = vector.shape_cast %99 : vector<8xf32> to vector<8x1xf32>
    %cst_56 = arith.constant 3.200000e+01 : f32
    %101 = vector.broadcast %cst_56 : f32 to vector<8x1xf32>
    %102 = arith.divf %100, %101 : vector<8x1xf32>
    %103 = vector.broadcast %102 : vector<8x1xf32> to vector<8x32xf32>
    %104 = arith.subf %98, %103 : vector<8x32xf32>
    %105 = arith.mulf %104, %104 : vector<8x32xf32>
    %cst_57 = arith.constant dense<0.000000e+00> : vector<8xf32>
    %106 = vector.multi_reduction <add>, %105, %cst_57 [1] : vector<8x32xf32> to vector<8xf32>
    %107 = vector.shape_cast %106 : vector<8xf32> to vector<8x1xf32>
    %cst_58 = arith.constant 3.200000e+01 : f32
    %108 = vector.broadcast %cst_58 : f32 to vector<8x1xf32>
    %109 = arith.divf %107, %108 : vector<8x1xf32>
    %110 = vector.broadcast %102 : vector<8x1xf32> to vector<8x32xf32>
    %111 = arith.subf %98, %110 : vector<8x32xf32>
    %cst_59 = arith.constant 9.99999974E-6 : f32
    %112 = vector.broadcast %cst_59 : f32 to vector<8x1xf32>
    %113 = arith.addf %109, %112 : vector<8x1xf32>
    %114 = math.rsqrt %113 : vector<8x1xf32>
    %115 = vector.broadcast %114 : vector<8x1xf32> to vector<8x32xf32>
    %116 = arith.mulf %111, %115 : vector<8x32xf32>
    %c0_60 = arith.constant 0 : index
    %c0_61 = arith.constant 0 : index
    %117 = vector.load %arg12[%c0_60, %c0_61] : memref<1x32xf32, #tpu.memory_space<vmem>>, vector<1x32xf32>
    %118 = vector.broadcast %117 : vector<1x32xf32> to vector<8x32xf32>
    %119 = arith.mulf %116, %118 : vector<8x32xf32>
    %c0_62 = arith.constant 0 : index
    %c0_63 = arith.constant 0 : index
    %120 = vector.load %arg13[%c0_62, %c0_63] : memref<1x32xf32, #tpu.memory_space<vmem>>, vector<1x32xf32>
    %121 = vector.broadcast %120 : vector<1x32xf32> to vector<8x32xf32>
    %122 = arith.addf %119, %121 : vector<8x32xf32>
    %c0_64 = arith.constant 0 : index
    %c0_65 = arith.constant 0 : index
    %123 = vector.load %arg10[%c0_64, %c0_65] : memref<32x32xf32, #tpu.memory_space<vmem>>, vector<32x32xf32>
    %cst_66 = arith.constant dense<0.000000e+00> : vector<8x32xf32>
    %124 = tpu.matmul %122, %123, %cst_66 {dimension_numbers = #tpu.dot_dimension_numbers<[1], [0], [0], [1], [0, 0, 1, 1], [], []>} : vector<8x32xf32>, vector<32x32xf32>, vector<8x32xf32> -> vector<8x32xf32>
    %c0_67 = arith.constant 0 : index
    %c0_68 = arith.constant 0 : index
    %125 = vector.load %arg11[%c0_67, %c0_68] : memref<1x32xf32, #tpu.memory_space<vmem>>, vector<1x32xf32>
    %126 = vector.broadcast %125 : vector<1x32xf32> to vector<8x32xf32>
    %127 = arith.addf %124, %126 : vector<8x32xf32>
    %c0_69 = arith.constant 0 : index
    %c0_70 = arith.constant 0 : index
    %c0_71 = arith.constant 0 : index
    %128 = vector.load %arg14[%c0_69, %c0_70, %c0_71] : memref<1x8x32xf32, #tpu.memory_space<vmem>>, vector<1x8x32xf32>
    %129 = vector.shape_cast %128 : vector<1x8x32xf32> to vector<8x32xf32>
    %130 = vector.shape_cast %127 : vector<8x32xf32> to vector<1x8x32xf32>
    tpu.vector_store %arg14[%c0_69, %c0_70, %c0_71], %130 {strides = array<i32>} : memref<1x8x32xf32, #tpu.memory_space<vmem>>, vector<1x8x32xf32>,
    return
  }
  func.func @transform_0(%arg0: i32) -> (i32, i32, i32) {
    %c0_i32 = arith.constant 0 : i32
    %c0_i32_0 = arith.constant 0 : i32
    %c0_i32_1 = arith.constant 0 : i32
    return %arg0, %c0_i32, %c0_i32_0 : i32, i32, i32
  }
  func.func @transform_1(%arg0: i32) -> (i32, i32, i32) {
    %c0_i32 = arith.constant 0 : i32
    %c0_i32_0 = arith.constant 0 : i32
    %c0_i32_1 = arith.constant 0 : i32
    return %arg0, %c0_i32, %c0_i32_0 : i32, i32, i32
  }
  func.func @transform_2(%arg0: i32) -> (i32, i32, i32) {
    %c0_i32 = arith.constant 0 : i32
    %c0_i32_0 = arith.constant 0 : i32
    %c0_i32_1 = arith.constant 0 : i32
    return %arg0, %c0_i32, %c0_i32_0 : i32, i32, i32
  }
  func.func @transform_3(%arg0: i32) -> (i32, i32) {
    %c0_i32 = arith.constant 0 : i32
    %c0_i32_0 = arith.constant 0 : i32
    %c0_i32_1 = arith.constant 0 : i32
    return %c0_i32, %c0_i32_0 : i32, i32
  }
  func.func @transform_4(%arg0: i32) -> (i32, i32) {
    %c0_i32 = arith.constant 0 : i32
    %c0_i32_0 = arith.constant 0 : i32
    %c0_i32_1 = arith.constant 0 : i32
    return %c0_i32, %c0_i32_0 : i32, i32
  }
  func.func @transform_5(%arg0: i32) -> (i32, i32) {
    %c0_i32 = arith.constant 0 : i32
    %c0_i32_0 = arith.constant 0 : i32
    %c0_i32_1 = arith.constant 0 : i32
    return %c0_i32, %c0_i32_0 : i32, i32
  }
  func.func @transform_6(%arg0: i32) -> (i32, i32) {
    %c0_i32 = arith.constant 0 : i32
    %c0_i32_0 = arith.constant 0 : i32
    %c0_i32_1 = arith.constant 0 : i32
    return %c0_i32, %c0_i32_0 : i32, i32
  }
  func.func @transform_7(%arg0: i32) -> (i32, i32) {
    %c0_i32 = arith.constant 0 : i32
    %c0_i32_0 = arith.constant 0 : i32
    %c0_i32_1 = arith.constant 0 : i32
    return %c0_i32, %c0_i32_0 : i32, i32
  }
  func.func @transform_8(%arg0: i32) -> (i32, i32) {
    %c0_i32 = arith.constant 0 : i32
    %c0_i32_0 = arith.constant 0 : i32
    %c0_i32_1 = arith.constant 0 : i32
    return %c0_i32, %c0_i32_0 : i32, i32
  }
  func.func @transform_9(%arg0: i32) -> (i32, i32) {
    %c0_i32 = arith.constant 0 : i32
    %c0_i32_0 = arith.constant 0 : i32
    %c0_i32_1 = arith.constant 0 : i32
    return %c0_i32, %c0_i32_0 : i32, i32
  }
  func.func @transform_10(%arg0: i32) -> (i32, i32) {
    %c0_i32 = arith.constant 0 : i32
    %c0_i32_0 = arith.constant 0 : i32
    %c0_i32_1 = arith.constant 0 : i32
    return %c0_i32, %c0_i32_0 : i32, i32
  }
  func.func @transform_11(%arg0: i32) -> (i32, i32) {
    %c0_i32 = arith.constant 0 : i32
    %c0_i32_0 = arith.constant 0 : i32
    %c0_i32_1 = arith.constant 0 : i32
    return %c0_i32, %c0_i32_0 : i32, i32
  }
  func.func @transform_12(%arg0: i32) -> (i32, i32) {
    %c0_i32 = arith.constant 0 : i32
    %c0_i32_0 = arith.constant 0 : i32
    %c0_i32_1 = arith.constant 0 : i32
    return %c0_i32, %c0_i32_0 : i32, i32
  }
  func.func @transform_13(%arg0: i32) -> (i32, i32, i32) {
    %c0_i32 = arith.constant 0 : i32
    %c0_i32_0 = arith.constant 0 : i32
    %c0_i32_1 = arith.constant 0 : i32
    return %arg0, %c0_i32, %c0_i32_0 : i32, i32, i32
  }
  func.func @transform_14(%arg0: i32) -> (i32, i32, i32, i32) {
    %c0_i32 = arith.constant 0 : i32
    %c0_i32_0 = arith.constant 0 : i32
    %c0_i32_1 = arith.constant 0 : i32
    %c0_i32_2 = arith.constant 0 : i32
    return %arg0, %c0_i32, %c0_i32_0, %c0_i32_1 : i32, i32, i32, i32
  }
}

</mosaic_0001>

<llo_original>
// kernel: tpu_custom_call.1
$region0: #{tpu_custom_call.1}
  #allocation0 [shape = 'u32[]', space=smem, size = 0x4, offset = 0x4, fixed_abs, tag = 'smem constant byte address 0x4 - core index']
  #allocation1 [shape = 'u32[144,128]{1,0:T(1,128)}', space=vmem, size = 0x12000, scoped, tag = 'internal scratch']
  %s0 = inlined_call_operand.hbm [shape: f32[2,8,32], index: 0, kind: input, shape index: {}]
  %s1 = inlined_call_operand.hbm [shape: f32[2,16,32], index: 1, kind: input, shape index: {}]
  %s2 = inlined_call_operand.hbm [shape: f32[2,16,32], index: 2, kind: input, shape index: {}]
  %s3 = inlined_call_operand.hbm [shape: f32[32,32], index: 3, kind: input, shape index: {}]
  %s4 = inlined_call_operand.vmem [shape: f32[1,32], index: 4, kind: input, shape index: {}]
  %s5 = inlined_call_operand.hbm [shape: f32[32,32], index: 5, kind: input, shape index: {}]
  %s6 = inlined_call_operand.vmem [shape: f32[1,32], index: 6, kind: input, shape index: {}]
  %s7 = inlined_call_operand.hbm [shape: f32[32,32], index: 7, kind: input, shape index: {}]
  %s8 = inlined_call_operand.hbm [shape: f32[1,32], index: 8, kind: input, shape index: {}]
  %s9 = inlined_call_operand.vmem [shape: f32[32,32], index: 9, kind: input, shape index: {}]
  %s10 = inlined_call_operand.vmem [shape: f32[1,32], index: 10, kind: input, shape index: {}]
  %s11 = inlined_call_operand.vmem [shape: f32[1,32], index: 11, kind: input, shape index: {}]
  %s12 = inlined_call_operand.vmem [shape: f32[1,32], index: 12, kind: input, shape index: {}]
  %s13 = inlined_call_operand.hbm [shape: f32[2,8,32], index: 13, kind: output, shape index: {0}]
  %s14 = inlined_call_operand.hbm [shape: f32[2,4,8,16], index: 14, kind: output, shape index: {1}]
  %15 = xla_tuple %s13, %s14
  %s16 = sld [smem:[#allocation0]]
  $region121: #{tpu_custom_call.1} parent=0
    _
  %s18 = ssub.s32 1, %s16
  %s19 = scalar_select 0, %s18, %s16
  $region1: #{tpu_custom_call.1} parent=0
    #allocation2 [shape = 'u8[8192]{0}', space=vmem, size = 0x2000, scoped, tag = 'input window, operand 0']
    #allocation3 [shape = 's32[2]{0}', space=sflag, size = 0x8, scoped, tag = 'scoped memory for tpu_custom_call.1']
    #allocation4 [shape = 's32[2]{0}', space=sflag, size = 0x8, scoped, tag = 'scoped memory for tpu_custom_call.1']
    #allocation5 [shape = 'u8[16384]{0}', space=vmem, size = 0x4000, scoped, tag = 'input window, operand 1']
    #allocation6 [shape = 's32[2]{0}', space=sflag, size = 0x8, scoped, tag = 'scoped memory for tpu_custom_call.1']
    #allocation7 [shape = 'u8[16384]{0}', space=vmem, size = 0x4000, scoped, tag = 'input window, operand 2']
    #allocation8 [shape = 'u8[16384]{0}', space=vmem, size = 0x4000, scoped, tag = 'input window, operand 3, single buffered']
    #allocation9 [shape = 's32[1]{0}', space=sflag, size = 0x4, scoped, tag = 'scoped memory for tpu_custom_call.1']
    #allocation10 [shape = 'u8[16384]{0}', space=vmem, size = 0x4000, scoped, tag = 'input window, operand 5, single buffered']
    #allocation11 [shape = 'u8[16384]{0}', space=vmem, size = 0x4000, scoped, tag = 'input window, operand 7, single buffered']
    #allocation12 [shape = 's32[1]{0}', space=sflag, size = 0x4, scoped, tag = 'scoped memory for tpu_custom_call.1']
    #allocation13 [shape = 'u8[512]{0}', space=vmem, size = 0x400, scoped, tag = 'input window, operand 8, single buffered']
    #allocation14 [shape = 'u8[8192]{0}', space=vmem, size = 0x2000, scoped, tag = 'output window, operand 0']
    #allocation15 [shape = 'u8[32768]{0}', space=vmem, size = 0x8000, scoped, tag = 'output window, operand 1']
    #allocation16 [shape = 's32[2]{0}', space=sflag, size = 0x8, scoped, tag = 'scoped memory for tpu_custom_call.1']
    %20 = vsyncpa [#allocation3], 0
    %s21 = scalar_lea.sflag [#allocation3], 1
    %22 = vsyncpa %s21, 0
    %23 = vsyncpa [#allocation6], 0
    %s24 = scalar_lea.sflag [#allocation6], 1
    %25 = vsyncpa %s24, 0
    %26 = vsyncpa [#allocation9], 0
    %27 = vsyncpa [#allocation12], 0
    %28 = vsyncpa [#allocation4], 0
    %s29 = scalar_lea.sflag [#allocation4], 1
    %30 = vsyncpa %s29, 0
    %31 = vsyncpa [#allocation16], 0
    %s32 = scalar_lea.sflag [#allocation16], 1
    %33 = vsyncpa %s32, 0
    loop: start=0, step=1, limit=4
    $region2: #{tpu_custom_call.1} parent=1 // loop_pre_header
      _
    $region3: #{tpu_custom_call.1} parent=1 // loop_header
      %s35 = sphi 0, %s39
      %p36 = scmp.ge.s32.totalorder %s35, 4
      %s45 = sphi 0, %s47
      %s48 = sphi 0, %s45
      %s49 = sphi 0, %s48
      %s65 = sphi 0, %s49
      %s71 = sphi 0, %s73
      %s74 = sphi 0, %s71
      %s75 = sphi 0, %s74
      %s91 = sphi 0, %s75
      %s97 = sphi 0, %s99
      %s100 = sphi 0, %s97
      %s101 = sphi 0, %s100
      %s117 = sphi 0, %s101
      %s121 = sphi 0, %s121
      %s123 = sphi 0, %s121
      %s124 = sphi 0, %s123
      %s138 = sphi 0, %s124
      %s142 = sphi 0, %s142
      %s144 = sphi 0, %s142
      %s145 = sphi 0, %s144
      %s159 = sphi 0, %s145
      %s163 = sphi 0, %s163
      %s165 = sphi 0, %s163
      %s166 = sphi 0, %s165
      %s180 = sphi 0, %s166
      %s184 = sphi 0, %s184
      %s186 = sphi 0, %s184
      %s187 = sphi 0, %s186
      %s201 = sphi 0, %s187
      %s205 = sphi 0, %s205
      %s207 = sphi 0, %s205
      %s208 = sphi 0, %s207
      %s222 = sphi 0, %s208
      %s226 = sphi 0, %s226
      %s228 = sphi 0, %s226
      %s229 = sphi 0, %s228
      %s243 = sphi 0, %s229
      %s247 = sphi 0, %s247
      %s249 = sphi 0, %s247
      %s250 = sphi 0, %s249
      %s264 = sphi 0, %s250
      %s268 = sphi 0, %s268
      %s270 = sphi 0, %s268
      %s271 = sphi 0, %s270
      %s285 = sphi 0, %s271
      %s289 = sphi 0, %s289
      %s291 = sphi 0, %s289
      %s292 = sphi 0, %s291
      %s306 = sphi 0, %s292
      %s310 = sphi 0, %s310
      %s312 = sphi 0, %s310
      %s313 = sphi 0, %s312
      %s327 = sphi 0, %s313
      %s333 = sphi 0, %s335
      %s336 = sphi 0, %s333
      %s337 = sphi 0, %s336
      %s353 = sphi 0, %s337
      %s359 = sphi 0, %s361
      %s362 = sphi 0, %s359
      %s363 = sphi 0, %s362
      %s379 = sphi 0, %s363
    $region4: #{tpu_custom_call.1} parent=1 // loop_header_branch
      %38 = sbr.rel (%p36) target = $region8
    $region5: #{tpu_custom_call.1} parent=1 // loop_body
      %s40 = ssub.s32 %s35, 1
      %s41 = ssub.s32 %s35, 2
      %s42 = sadd.s32 %s35, 1
      %s43 = ssub.s32 %s35, %s42
      %p44 = scmp.eq.s32.totalorder %s43, 0
      %s46 = sadd.s32 %s45, 1
      %s47 = scalar_select %p44, %s45, %s46
      %p50 = pneg %p44
      %p51 = scmp.eq.s32.totalorder %s35, 1
      %p52 = por %p50, %p51
      %p53 = scmp.ne.s32.totalorder %s45, %s48
      %p54 = scmp.eq.s32.totalorder %s35, 0
      %p55 = por %p53, %p54
      %p56 = scmp.ne.s32.totalorder %s45, %s48
      %p57 = scmp.eq.s32.totalorder %s40, 1
      %p58 = por %p56, %p57
      %p59 = scmp.ne.s32.totalorder %s48, %s49
      %p60 = scmp.eq.s32.totalorder %s40, 0
      %p61 = por %p59, %p60
      %p62 = scmp.ne.s32.totalorder %s48, %s49
      %p63 = scmp.eq.s32.totalorder %s41, 1
      %p64 = por %p62, %p63
      %p66 = scmp.ne.s32.totalorder %s49, %s65
      %p67 = scmp.eq.s32.totalorder %s41, 0
      %p68 = por %p66, %p67
      %s69 = ssub.s32 %s35, %s42
      %p70 = scmp.eq.s32.totalorder %s69, 0
      %s72 = sadd.s32 %s71, 1
      %s73 = scalar_select %p70, %s71, %s72
      %p76 = pneg %p70
      %p77 = scmp.eq.s32.totalorder %s35, 1
      %p78 = por %p76, %p77
      %p79 = scmp.ne.s32.totalorder %s71, %s74
      %p80 = scmp.eq.s32.totalorder %s35, 0
      %p81 = por %p79, %p80
      %p82 = scmp.ne.s32.totalorder %s71, %s74
      %p83 = scmp.eq.s32.totalorder %s40, 1
      %p84 = por %p82, %p83
      %p85 = scmp.ne.s32.totalorder %s74, %s75
      %p86 = scmp.eq.s32.totalorder %s40, 0
      %p87 = por %p85, %p86
      %p88 = scmp.ne.s32.totalorder %s74, %s75
      %p89 = scmp.eq.s32.totalorder %s41, 1
      %p90 = por %p88, %p89
      %p92 = scmp.ne.s32.totalorder %s75, %s91
      %p93 = scmp.eq.s32.totalorder %s41, 0
      %p94 = por %p92, %p93
      %s95 = ssub.s32 %s35, %s42
      %p96 = scmp.eq.s32.totalorder %s95, 0
      %s98 = sadd.s32 %s97, 1
      %s99 = scalar_select %p96, %s97, %s98
      %p102 = pneg %p96
      %p103 = scmp.eq.s32.totalorder %s35, 1
      %p104 = por %p102, %p103
      %p105 = scmp.ne.s32.totalorder %s97, %s100
      %p106 = scmp.eq.s32.totalorder %s35, 0
      %p107 = por %p105, %p106
      %p108 = scmp.ne.s32.totalorder %s97, %s100
      %p109 = scmp.eq.s32.totalorder %s40, 1
      %p110 = por %p108, %p109
      %p111 = scmp.ne.s32.totalorder %s100, %s101
      %p112 = scmp.eq.s32.totalorder %s40, 0
      %p113 = por %p111, %p112
      %p114 = scmp.ne.s32.totalorder %s100, %s101
      %p115 = scmp.eq.s32.totalorder %s41, 1
      %p116 = por %p114, %p115
      %p118 = scmp.ne.s32.totalorder %s101, %s117
      %p119 = scmp.eq.s32.totalorder %s41, 0
      %p120 = por %p118, %p119
      %s122 = sadd.s32 %s121, 1
      %p125 = scmp.eq.s32.totalorder %s35, 1
      %p126 = scmp.ne.s32.totalorder %s121, %s123
      %p127 = scmp.eq.s32.totalorder %s35, 0
      %p128 = por %p126, %p127
      %p129 = scmp.ne.s32.totalorder %s121, %s123
      %p130 = scmp.eq.s32.totalorder %s40, 1
      %p131 = por %p129, %p130
      %p132 = scmp.ne.s32.totalorder %s123, %s124
      %p133 = scmp.eq.s32.totalorder %s40, 0
      %p134 = por %p132, %p133
      %p135 = scmp.ne.s32.totalorder %s123, %s124
      %p136 = scmp.eq.s32.totalorder %s41, 1
      %p137 = por %p135, %p136
      %p139 = scmp.ne.s32.totalorder %s124, %s138
      %p140 = scmp.eq.s32.totalorder %s41, 0
      %p141 = por %p139, %p140
      %s143 = sadd.s32 %s142, 1
      %p146 = scmp.eq.s32.totalorder %s35, 1
      %p147 = scmp.ne.s32.totalorder %s142, %s144
      %p148 = scmp.eq.s32.totalorder %s35, 0
      %p149 = por %p147, %p148
      %p150 = scmp.ne.s32.totalorder %s142, %s144
      %p151 = scmp.eq.s32.totalorder %s40, 1
      %p152 = por %p150, %p151
      %p153 = scmp.ne.s32.totalorder %s144, %s145
      %p154 = scmp.eq.s32.totalorder %s40, 0
      %p155 = por %p153, %p154
      %p156 = scmp.ne.s32.totalorder %s144, %s145
      %p157 = scmp.eq.s32.totalorder %s41, 1
      %p158 = por %p156, %p157
      %p160 = scmp.ne.s32.totalorder %s145, %s159
      %p161 = scmp.eq.s32.totalorder %s41, 0
      %p162 = por %p160, %p161
      %s164 = sadd.s32 %s163, 1
      %p167 = scmp.eq.s32.totalorder %s35, 1
      %p168 = scmp.ne.s32.totalorder %s163, %s165
      %p169 = scmp.eq.s32.totalorder %s35, 0
      %p170 = por %p168, %p169
      %p171 = scmp.ne.s32.totalorder %s163, %s165
      %p172 = scmp.eq.s32.totalorder %s40, 1
      %p173 = por %p171, %p172
      %p174 = scmp.ne.s32.totalorder %s165, %s166
      %p175 = scmp.eq.s32.totalorder %s40, 0
      %p176 = por %p174, %p175
      %p177 = scmp.ne.s32.totalorder %s165, %s166
      %p178 = scmp.eq.s32.totalorder %s41, 1
      %p179 = por %p177, %p178
      %p181 = scmp.ne.s32.totalorder %s166, %s180
      %p182 = scmp.eq.s32.totalorder %s41, 0
      %p183 = por %p181, %p182
      %s185 = sadd.s32 %s184, 1
      %p188 = scmp.eq.s32.totalorder %s35, 1
      %p189 = scmp.ne.s32.totalorder %s184, %s186
      %p190 = scmp.eq.s32.totalorder %s35, 0
      %p191 = por %p189, %p190
      %p192 = scmp.ne.s32.totalorder %s184, %s186
      %p193 = scmp.eq.s32.totalorder %s40, 1
      %p194 = por %p192, %p193
      %p195 = scmp.ne.s32.totalorder %s186, %s187
      %p196 = scmp.eq.s32.totalorder %s40, 0
      %p197 = por %p195, %p196
      %p198 = scmp.ne.s32.totalorder %s186, %s187
      %p199 = scmp.eq.s32.totalorder %s41, 1
      %p200 = por %p198, %p199
      %p202 = scmp.ne.s32.totalorder %s187, %s201
      %p203 = scmp.eq.s32.totalorder %s41, 0
      %p204 = por %p202, %p203
      %s206 = sadd.s32 %s205, 1
      %p209 = scmp.eq.s32.totalorder %s35, 1
      %p210 = scmp.ne.s32.totalorder %s205, %s207
      %p211 = scmp.eq.s32.totalorder %s35, 0
      %p212 = por %p210, %p211
      %p213 = scmp.ne.s32.totalorder %s205, %s207
      %p214 = scmp.eq.s32.totalorder %s40, 1
      %p215 = por %p213, %p214
      %p216 = scmp.ne.s32.totalorder %s207, %s208
      %p217 = scmp.eq.s32.totalorder %s40, 0
      %p218 = por %p216, %p217
      %p219 = scmp.ne.s32.totalorder %s207, %s208
      %p220 = scmp.eq.s32.totalorder %s41, 1
      %p221 = por %p219, %p220
      %p223 = scmp.ne.s32.totalorder %s208, %s222
      %p224 = scmp.eq.s32.totalorder %s41, 0
      %p225 = por %p223, %p224
      %s227 = sadd.s32 %s226, 1
      %p230 = scmp.eq.s32.totalorder %s35, 1
      %p231 = scmp.ne.s32.totalorder %s226, %s228
      %p232 = scmp.eq.s32.totalorder %s35, 0
      %p233 = por %p231, %p232
      %p234 = scmp.ne.s32.totalorder %s226, %s228
      %p235 = scmp.eq.s32.totalorder %s40, 1
      %p236 = por %p234, %p235
      %p237 = scmp.ne.s32.totalorder %s228, %s229
      %p238 = scmp.eq.s32.totalorder %s40, 0
      %p239 = por %p237, %p238
      %p240 = scmp.ne.s32.totalorder %s228, %s229
      %p241 = scmp.eq.s32.totalorder %s41, 1
      %p242 = por %p240, %p241
      %p244 = scmp.ne.s32.totalorder %s229, %s243
      %p245 = scmp.eq.s32.totalorder %s41, 0
      %p246 = por %p244, %p245
      %s248 = sadd.s32 %s247, 1
      %p251 = scmp.eq.s32.totalorder %s35, 1
      %p252 = scmp.ne.s32.totalorder %s247, %s249
      %p253 = scmp.eq.s32.totalorder %s35, 0
      %p254 = por %p252, %p253
      %p255 = scmp.ne.s32.totalorder %s247, %s249
      %p256 = scmp.eq.s32.totalorder %s40, 1
      %p257 = por %p255, %p256
      %p258 = scmp.ne.s32.totalorder %s249, %s250
      %p259 = scmp.eq.s32.totalorder %s40, 0
      %p260 = por %p258, %p259
      %p261 = scmp.ne.s32.totalorder %s249, %s250
      %p262 = scmp.eq.s32.totalorder %s41, 1
      %p263 = por %p261, %p262
      %p265 = scmp.ne.s32.totalorder %s250, %s264
      %p266 = scmp.eq.s32.totalorder %s41, 0
      %p267 = por %p265, %p266
      %s269 = sadd.s32 %s268, 1
      %p272 = scmp.eq.s32.totalorder %s35, 1
      %p273 = scmp.ne.s32.totalorder %s268, %s270
      %p274 = scmp.eq.s32.totalorder %s35, 0
      %p275 = por %p273, %p274
      %p276 = scmp.ne.s32.totalorder %s268, %s270
      %p277 = scmp.eq.s32.totalorder %s40, 1
      %p278 = por %p276, %p277
      %p279 = scmp.ne.s32.totalorder %s270, %s271
      %p280 = scmp.eq.s32.totalorder %s40, 0
      %p281 = por %p279, %p280
      %p282 = scmp.ne.s32.totalorder %s270, %s271
      %p283 = scmp.eq.s32.totalorder %s41, 1
      %p284 = por %p282, %p283
      %p286 = scmp.ne.s32.totalorder %s271, %s285
      %p287 = scmp.eq.s32.totalorder %s41, 0
      %p288 = por %p286, %p287
      %s290 = sadd.s32 %s289, 1
      %p293 = scmp.eq.s32.totalorder %s35, 1
      %p294 = scmp.ne.s32.totalorder %s289, %s291
      %p295 = scmp.eq.s32.totalorder %s35, 0
      %p296 = por %p294, %p295
      %p297 = scmp.ne.s32.totalorder %s289, %s291
      %p298 = scmp.eq.s32.totalorder %s40, 1
      %p299 = por %p297, %p298
      %p300 = scmp.ne.s32.totalorder %s291, %s292
      %p301 = scmp.eq.s32.totalorder %s40, 0
      %p302 = por %p300, %p301
      %p303 = scmp.ne.s32.totalorder %s291, %s292
      %p304 = scmp.eq.s32.totalorder %s41, 1
      %p305 = por %p303, %p304
      %p307 = scmp.ne.s32.totalorder %s292, %s306
      %p308 = scmp.eq.s32.totalorder %s41, 0
      %p309 = por %p307, %p308
      %s311 = sadd.s32 %s310, 1
      %p314 = scmp.eq.s32.totalorder %s35, 1
      %p315 = scmp.ne.s32.totalorder %s310, %s312
      %p316 = scmp.eq.s32.totalorder %s35, 0
      %p317 = por %p315, %p316
      %p318 = scmp.ne.s32.totalorder %s310, %s312
      %p319 = scmp.eq.s32.totalorder %s40, 1
      %p320 = por %p318, %p319
      %p321 = scmp.ne.s32.totalorder %s312, %s313
      %p322 = scmp.eq.s32.totalorder %s40, 0
      %p323 = por %p321, %p322
      %p324 = scmp.ne.s32.totalorder %s312, %s313
      %p325 = scmp.eq.s32.totalorder %s41, 1
      %p326 = por %p324, %p325
      %p328 = scmp.ne.s32.totalorder %s313, %s327
      %p329 = scmp.eq.s32.totalorder %s41, 0
      %p330 = por %p328, %p329
      %s331 = ssub.s32 %s35, %s42
      %p332 = scmp.eq.s32.totalorder %s331, 0
      %s334 = sadd.s32 %s333, 1
      %s335 = scalar_select %p332, %s333, %s334
      %p338 = pneg %p332
      %p339 = scmp.eq.s32.totalorder %s35, 1
      %p340 = por %p338, %p339
      %p341 = scmp.ne.s32.totalorder %s333, %s336
      %p342 = scmp.eq.s32.totalorder %s35, 0
      %p343 = por %p341, %p342
      %p344 = scmp.ne.s32.totalorder %s333, %s336
      %p345 = scmp.eq.s32.totalorder %s40, 1
      %p346 = por %p344, %p345
      %p347 = scmp.ne.s32.totalorder %s336, %s337
      %p348 = scmp.eq.s32.totalorder %s40, 0
      %p349 = por %p347, %p348
      %p350 = scmp.ne.s32.totalorder %s336, %s337
      %p351 = scmp.eq.s32.totalorder %s41, 1
      %p352 = por %p350, %p351
      %p354 = scmp.ne.s32.totalorder %s337, %s353
      %p355 = scmp.eq.s32.totalorder %s41, 0
      %p356 = por %p354, %p355
      %s357 = ssub.s32 %s35, %s42
      %p358 = scmp.eq.s32.totalorder %s357, 0
      %s360 = sadd.s32 %s359, 1
      %s361 = scalar_select %p358, %s359, %s360
      %p364 = pneg %p358
      %p365 = scmp.eq.s32.totalorder %s35, 1
      %p366 = por %p364, %p365
      %p367 = scmp.ne.s32.totalorder %s359, %s362
      %p368 = scmp.eq.s32.totalorder %s35, 0
      %p369 = por %p367, %p368
      %p370 = scmp.ne.s32.totalorder %s359, %s362
      %p371 = scmp.eq.s32.totalorder %s40, 1
      %p372 = por %p370, %p371
      %p373 = scmp.ne.s32.totalorder %s362, %s363
      %p374 = scmp.eq.s32.totalorder %s40, 0
      %p375 = por %p373, %p374
      %p376 = scmp.ne.s32.totalorder %s362, %s363
      %p377 = scmp.eq.s32.totalorder %s41, 1
      %p378 = por %p376, %p377
      %p380 = scmp.ne.s32.totalorder %s363, %s379
      %p381 = scmp.eq.s32.totalorder %s41, 0
      %p382 = por %p380, %p381
      %p383 = scmp.le.s32.totalorder 1, %s35
      %p384 = scmp.lt.s32.totalorder %s35, 3
      %p385 = pnand %p383, %p384
      %p386 = pneg %p385
      // Predicated region
      $region9: #{tpu_custom_call.1} parent=5 // pred_check
        _
      $region10: #{tpu_custom_call.1} parent=5 // pred_check_branch
        %388 = sbr.rel (%p385) target = $region12
      $region11: #{tpu_custom_call.1} parent=5 // pred_region
        %s389 = ssub.s32 %s35, 1
        // Predicated region
        $region13: #{tpu_custom_call.1} parent=11 // pred_check
          %p390 = pneg %p134
        $region14: #{tpu_custom_call.1} parent=11 // pred_check_branch
          %392 = sbr.rel (%p390) target = $region16
        $region15: #{tpu_custom_call.1} parent=11 // pred_region
          %s394 = ssub.s32 512, 512
          %395 = vsyncadd [#allocation9], %s394
          %s396 = sshll.u32 [#allocation8], 4
          %s397 = int_to_ptr.vmem [resolvable:$true] %s396
          %402 = dma.hbm_to_vmem [thread:$0]  %s3, 512, %s397, [#allocation9], 128, 128, 8
        $region16: #{tpu_custom_call.1} parent=11 // pred_fallthru
          _
        // Predicated region
        $region17: #{tpu_custom_call.1} parent=11 // pred_check
          %p403 = pneg %p155
        $region18: #{tpu_custom_call.1} parent=11 // pred_check_branch
          %405 = sbr.rel (%p403) target = $region20
        $region19: #{tpu_custom_call.1} parent=11 // pred_region
          _
        $region20: #{tpu_custom_call.1} parent=11 // pred_fallthru
          _
        // Predicated region
        $region21: #{tpu_custom_call.1} parent=11 // pred_check
          %p406 = pneg %p176
        $region22: #{tpu_custom_call.1} parent=11 // pred_check_branch
          %408 = sbr.rel (%p406) target = $region24
        $region23: #{tpu_custom_call.1} parent=11 // pred_region
          %s410 = ssub.s32 512, 512
          %411 = vsyncadd [#allocation9], %s410
          %s412 = sshll.u32 [#allocation10], 4
          %s413 = int_to_ptr.vmem [resolvable:$true] %s412
          %418 = dma.hbm_to_vmem [thread:$0]  %s5, 512, %s413, [#allocation9], 128, 128, 8
        $region24: #{tpu_custom_call.1} parent=11 // pred_fallthru
          _
        // Predicated region
        $region25: #{tpu_custom_call.1} parent=11 // pred_check
          %p419 = pneg %p197
        $region26: #{tpu_custom_call.1} parent=11 // pred_check_branch
          %421 = sbr.rel (%p419) target = $region28
        $region27: #{tpu_custom_call.1} parent=11 // pred_region
          _
        $region28: #{tpu_custom_call.1} parent=11 // pred_fallthru
          _
        // Predicated region
        $region29: #{tpu_custom_call.1} parent=11 // pred_check
          %p422 = pneg %p218
        $region30: #{tpu_custom_call.1} parent=11 // pred_check_branch
          %424 = sbr.rel (%p422) target = $region32
        $region31: #{tpu_custom_call.1} parent=11 // pred_region
          %s426 = ssub.s32 512, 512
          %427 = vsyncadd [#allocation12], %s426
          %s428 = sshll.u32 [#allocation11], 4
          %s429 = int_to_ptr.vmem [resolvable:$true] %s428
          %434 = dma.hbm_to_vmem [thread:$0]  %s7, 512, %s429, [#allocation12], 128, 128, 8
        $region32: #{tpu_custom_call.1} parent=11 // pred_fallthru
          _
        // Predicated region
        $region33: #{tpu_custom_call.1} parent=11 // pred_check
          %p435 = pneg %p239
        $region34: #{tpu_custom_call.1} parent=11 // pred_check_branch
          %437 = sbr.rel (%p435) target = $region36
        $region35: #{tpu_custom_call.1} parent=11 // pred_region
          %s439 = ssub.s32 16, 16
          %440 = vsyncadd [#allocation12], %s439
          %s442 = sshll.u32 [#allocation13], 4
          %s443 = int_to_ptr.vmem [resolvable:$true] %s442
          %445 = dma.hbm_to_vmem [thread:$0]  %s8, 16, %s443, [#allocation12]
        $region36: #{tpu_custom_call.1} parent=11 // pred_fallthru
          _
        // Predicated region
        $region37: #{tpu_custom_call.1} parent=11 // pred_check
          %p446 = pneg %p260
        $region38: #{tpu_custom_call.1} parent=11 // pred_check_branch
          %448 = sbr.rel (%p446) target = $region40
        $region39: #{tpu_custom_call.1} parent=11 // pred_region
          _
        $region40: #{tpu_custom_call.1} parent=11 // pred_fallthru
          _
        // Predicated region
        $region41: #{tpu_custom_call.1} parent=11 // pred_check
          %p449 = pneg %p281
        $region42: #{tpu_custom_call.1} parent=11 // pred_check_branch
          %451 = sbr.rel (%p449) target = $region44
        $region43: #{tpu_custom_call.1} parent=11 // pred_region
          _
        $region44: #{tpu_custom_call.1} parent=11 // pred_fallthru
          _
        // Predicated region
        $region45: #{tpu_custom_call.1} parent=11 // pred_check
          %p452 = pneg %p302
        $region46: #{tpu_custom_call.1} parent=11 // pred_check_branch
          %454 = sbr.rel (%p452) target = $region48
        $region47: #{tpu_custom_call.1} parent=11 // pred_region
          _
        $region48: #{tpu_custom_call.1} parent=11 // pred_fallthru
          _
        // Predicated region
        $region49: #{tpu_custom_call.1} parent=11 // pred_check
          %p455 = pneg %p323
        $region50: #{tpu_custom_call.1} parent=11 // pred_check_branch
          %457 = sbr.rel (%p455) target = $region52
        $region51: #{tpu_custom_call.1} parent=11 // pred_region
          _
        $region52: #{tpu_custom_call.1} parent=11 // pred_fallthru
          _
      $region12: #{tpu_custom_call.1} parent=5 // pred_fallthru
        _
      %p458 = scmp.lt.s32.totalorder %s35, 2
      // Predicated region
      $region53: #{tpu_custom_call.1} parent=5 // pred_check
        %p459 = pneg %p458
      $region54: #{tpu_custom_call.1} parent=5 // pred_check_branch
        %461 = sbr.rel (%p459) target = $region56
      $region55: #{tpu_custom_call.1} parent=5 // pred_region
        // Predicated region
        $region57: #{tpu_custom_call.1} parent=55 // pred_check
          %p462 = pneg %p55
        $region58: #{tpu_custom_call.1} parent=55 // pred_check_branch
          %464 = sbr.rel (%p462) target = $region60
        $region59: #{tpu_custom_call.1} parent=55 // pred_region
          %s465 = sand.u32 %s45, 1
          %s466 = scalar_lea.sflag [#allocation3], %s465
          %s467 = sand.u32 %s45, 1
          %s468 = smul.addr %s467, 8
          %s469 = scalar_lea.vmem [#allocation2], %s468
          %s471 = ssub.s32 128, 128
          %472 = vsyncadd %s466, %s471
          %s473 = smul.addr %s35, 128
          %s474 = scalar_lea.hbm %s0, %s473
          %s476 = sshll.u32 %s469, 4
          %s477 = int_to_ptr.vmem [resolvable:$true] %s476
          %479 = dma.hbm_to_vmem [thread:$0]  %s474, 128, %s477, %s466
        $region60: #{tpu_custom_call.1} parent=55 // pred_fallthru
          _
        // Predicated region
        $region61: #{tpu_custom_call.1} parent=55 // pred_check
          %p480 = pneg %p81
        $region62: #{tpu_custom_call.1} parent=55 // pred_check_branch
          %482 = sbr.rel (%p480) target = $region64
        $region63: #{tpu_custom_call.1} parent=55 // pred_region
          %s483 = sand.u32 %s35, 1
          %s484 = scalar_lea.sflag [#allocation6], %s483
          %s485 = sand.u32 %s71, 1
          %s486 = smul.addr %s485, 16
          %s487 = scalar_lea.vmem [#allocation5], %s486
          %s489 = ssub.s32 256, 256
          %490 = vsyncadd %s484, %s489
          %s491 = smul.addr %s35, 2
          %s492 = smul.addr %s491, 128
          %s493 = scalar_lea.hbm %s1, %s492
          %s494 = sshll.u32 %s487, 4
          %s495 = int_to_ptr.vmem [resolvable:$true] %s494
          %500 = dma.hbm_to_vmem [thread:$0]  %s493, 256, %s495, %s484, 128, 128, 8
        $region64: #{tpu_custom_call.1} parent=55 // pred_fallthru
          _
        // Predicated region
        $region65: #{tpu_custom_call.1} parent=55 // pred_check
          %p501 = pneg %p107
        $region66: #{tpu_custom_call.1} parent=55 // pred_check_branch
          %503 = sbr.rel (%p501) target = $region68
        $region67: #{tpu_custom_call.1} parent=55 // pred_region
          %s504 = sand.u32 %s35, 1
          %s505 = scalar_lea.sflag [#allocation6], %s504
          %s506 = sand.u32 %s97, 1
          %s507 = smul.addr %s506, 16
          %s508 = scalar_lea.vmem [#allocation7], %s507
          %s510 = ssub.s32 256, 256
          %511 = vsyncadd %s505, %s510
          %s512 = smul.addr %s35, 2
          %s513 = smul.addr %s512, 128
          %s514 = scalar_lea.hbm %s2, %s513
          %s515 = sshll.u32 %s508, 4
          %s516 = int_to_ptr.vmem [resolvable:$true] %s515
          %521 = dma.hbm_to_vmem [thread:$0]  %s514, 256, %s516, %s505, 128, 128, 8
        $region68: #{tpu_custom_call.1} parent=55 // pred_fallthru
          _
      $region56: #{tpu_custom_call.1} parent=5 // pred_fallthru
        _
      %p522 = scmp.le.s32.totalorder 1, %s35
      %p523 = scmp.lt.s32.totalorder %s35, 3
      %p524 = pnand %p522, %p523
      %p525 = pneg %p524
      // Predicated region
      $region69: #{tpu_custom_call.1} parent=5 // pred_check
        _
      $region70: #{tpu_custom_call.1} parent=5 // pred_check_branch
        %527 = sbr.rel (%p524) target = $region72
      $region71: #{tpu_custom_call.1} parent=5 // pred_region
        %s528 = ssub.s32 %s35, 1
        %s529 = sand.u32 %s48, 1
        %s530 = scalar_lea.sflag [#allocation3], %s529
        %s531 = sand.u32 %s48, 1
        %s532 = smul.addr %s531, 8
        %s533 = scalar_lea.vmem [#allocation2], %s532
        // Predicated region
        $region73: #{tpu_custom_call.1} parent=71 // pred_check
          %p534 = pneg %p61
        $region74: #{tpu_custom_call.1} parent=71 // pred_check_branch
          %536 = sbr.rel (%p534) target = $region76
        $region75: #{tpu_custom_call.1} parent=71 // pred_region
          %537 = dma.done %s530, 128
        $region76: #{tpu_custom_call.1} parent=71 // pred_fallthru
          _
        %s538 = sand.u32 %s40, 1
        %s539 = scalar_lea.sflag [#allocation6], %s538
        %s540 = sand.u32 %s74, 1
        %s541 = smul.addr %s540, 16
        %s542 = scalar_lea.vmem [#allocation5], %s541
        // Predicated region
        $region77: #{tpu_custom_call.1} parent=71 // pred_check
          %p543 = pneg %p87
        $region78: #{tpu_custom_call.1} parent=71 // pred_check_branch
          %545 = sbr.rel (%p543) target = $region80
        $region79: #{tpu_custom_call.1} parent=71 // pred_region
          %546 = dma.done %s539, 256
        $region80: #{tpu_custom_call.1} parent=71 // pred_fallthru
          _
        %s547 = sand.u32 %s40, 1
        %s548 = scalar_lea.sflag [#allocation6], %s547
        %s549 = sand.u32 %s100, 1
        %s550 = smul.addr %s549, 16
        %s551 = scalar_lea.vmem [#allocation7], %s550
        // Predicated region
        $region81: #{tpu_custom_call.1} parent=71 // pred_check
          %p552 = pneg %p113
        $region82: #{tpu_custom_call.1} parent=71 // pred_check_branch
          %554 = sbr.rel (%p552) target = $region84
        $region83: #{tpu_custom_call.1} parent=71 // pred_region
          %555 = dma.done %s548, 256
        $region84: #{tpu_custom_call.1} parent=71 // pred_fallthru
          _
        // Predicated region
        $region85: #{tpu_custom_call.1} parent=71 // pred_check
          %p556 = pneg %p134
        $region86: #{tpu_custom_call.1} parent=71 // pred_check_branch
          %558 = sbr.rel (%p556) target = $region88
        $region87: #{tpu_custom_call.1} parent=71 // pred_region
          %559 = dma.done [#allocation9], 512
        $region88: #{tpu_custom_call.1} parent=71 // pred_fallthru
          _
        // Predicated region
        $region89: #{tpu_custom_call.1} parent=71 // pred_check
          %p560 = pneg %p176
        $region90: #{tpu_custom_call.1} parent=71 // pred_check_branch
          %562 = sbr.rel (%p560) target = $region92
        $region91: #{tpu_custom_call.1} parent=71 // pred_region
          %563 = dma.done [#allocation9], 512
        $region92: #{tpu_custom_call.1} parent=71 // pred_fallthru
          _
        // Predicated region
        $region93: #{tpu_custom_call.1} parent=71 // pred_check
          %p564 = pneg %p218
        $region94: #{tpu_custom_call.1} parent=71 // pred_check_branch
          %566 = sbr.rel (%p564) target = $region96
        $region95: #{tpu_custom_call.1} parent=71 // pred_region
          %567 = dma.done [#allocation12], 512
        $region96: #{tpu_custom_call.1} parent=71 // pred_fallthru
          _
        // Predicated region
        $region97: #{tpu_custom_call.1} parent=71 // pred_check
          %p568 = pneg %p239
        $region98: #{tpu_custom_call.1} parent=71 // pred_check_branch
          %570 = sbr.rel (%p568) target = $region100
        $region99: #{tpu_custom_call.1} parent=71 // pred_region
          %571 = dma.done [#allocation12], 16
        $region100: #{tpu_custom_call.1} parent=71 // pred_fallthru
          _
        %s572 = sand.u32 %s48, 1
        %s573 = scalar_lea.sflag [#allocation3], %s572
        %s574 = sand.u32 %s48, 1
        %s575 = smul.addr %s574, 8
        %s576 = scalar_lea.vmem [#allocation2], %s575
        %p577 = pneg %p61
        %p578 = pneg %p58
        %s579 = sand.u32 %s40, 1
        %s580 = scalar_lea.sflag [#allocation6], %s579
        %s581 = sand.u32 %s74, 1
        %s582 = smul.addr %s581, 16
        %s583 = scalar_lea.vmem [#allocation5], %s582
        %p584 = pneg %p87
        %p585 = pneg %p84
        %s586 = sand.u32 %s40, 1
        %s587 = scalar_lea.sflag [#allocation6], %s586
        %s588 = sand.u32 %s100, 1
        %s589 = smul.addr %s588, 16
        %s590 = scalar_lea.vmem [#allocation7], %s589
        %p591 = pneg %p113
        %p592 = pneg %p110
        %p593 = pneg %p134
        %p594 = pneg %p131
        %p595 = pneg %p155
        %p596 = pneg %p152
        %p597 = pneg %p176
        %p598 = pneg %p173
        %p599 = pneg %p197
        %p600 = pneg %p194
        %p601 = pneg %p218
        %p602 = pneg %p215
        %p603 = pneg %p239
        %p604 = pneg %p236
        %p605 = pneg %p260
        %p606 = pneg %p257
        %p607 = pneg %p281
        %p608 = pneg %p278
        %p609 = pneg %p302
        %p610 = pneg %p299
        %p611 = pneg %p323
        %p612 = pneg %p320
        %p613 = pneg %p349
        %p614 = pneg %p346
        %s615 = sand.u32 %s336, 1
        %s616 = scalar_lea.sflag [#allocation4], %s615
        %s617 = sand.u32 %s336, 1
        %s618 = smul.addr %s617, 8
        %s619 = scalar_lea.vmem [#allocation14], %s618
        %p620 = pneg %p375
        %p621 = pneg %p372
        %s622 = sand.u32 %s362, 1
        %s623 = scalar_lea.sflag [#allocation16], %s622
        %s624 = sand.u32 %s362, 1
        %s625 = smul.addr %s624, 32
        %s626 = scalar_lea.vmem [#allocation15], %s625
        %v627 = vld [vmem:[%s533] sm:$0xff]
        %v628 = vld [vmem:[%s542] sm:$0xff]
        %v629 = vld [vmem:[%s542 + $0x8] sm:$0xff]
        %v630 = vld [vmem:[%s551] sm:$0xff]
        %v631 = vld [vmem:[%s551 + $0x8] sm:$0xff]
        %v632 = vld [vmem:[#allocation8] sm:$0xff]
        %v633 = vld [vmem:[#allocation8 + $0x8] sm:$0xff]
        %v634 = vld [vmem:[#allocation8 + $0x10] sm:$0xff]
        %v635 = vld [vmem:[#allocation8 + $0x18] sm:$0xff]
        %v636 = vld [vmem:[%s4] sm:$0x1]
        %v638 = vlaneseq
        %v639 = vshrl.u32 %v638, 7
        %v640 = vsub.s32 0, %v639
        %v641 = vrot.slane %v636, %v640
        %vm643 = vcmask 261120
        %v645 = vsel %vm643, %v627, 0
        %647 = vmatprep.subr.mxu0 0.0
        %648 = vmatpush1.msra.mxu0 %v632
        %649 = vmatprep.subr.mxu0 0.0
        %650 = vmatpush1.msra.mxu0 %v633
        %651 = vmatprep.subr.mxu0 0.0
        %652 = vmatpush1.msra.mxu0 %v634
        %653 = vmatprep.subr.mxu0 0.0
        %654 = vmatpush1.msra.mxu0 %v635
        %655 = vmatprep.subr.mxu0 0.0
        %656 = vmatpush1.msra.mxu0 0.0
        %657 = vmatprep.subr.mxu0 0.0
        %658 = vmatpush1.msra.mxu0 0.0
        %659 = vmatprep.subr.mxu0 0.0
        %660 = vmatpush1.msra.mxu0 0.0
        %661 = vmatprep.subr.mxu0 0.0
        %662 = vmatpush1.msra.mxu0 0.0
        %663 = vmatprep.subr.mxu0 0.0
        %664 = vmatpush1.msra.mxu0 0.0
        %665 = vmatprep.subr.mxu0 0.0
        %666 = vmatpush1.msra.mxu0 0.0
        %667 = vmatprep.subr.mxu0 0.0
        %668 = vmatpush1.msra.mxu0 0.0
        %669 = vmatprep.subr.mxu0 0.0
        %670 = vmatpush1.msra.mxu0 0.0
        %671 = vmatprep.subr.mxu0 0.0
        %672 = vmatpush1.msra.mxu0 0.0
        %673 = vmatprep.subr.mxu0 0.0
        %674 = vmatpush1.msra.mxu0 0.0
        %675 = vmatprep.subr.mxu0 0.0
        %676 = vmatpush1.msra.mxu0 0.0
        %677 = vmatprep.subr.mxu0 0.0
        %678 = vmatpush1.msra.mxu0 0.0
        %679 = vmatprep.subr.mxu0 0.0
        %680 = vmatpush1.msra.mxu0 0.0
        %681 = vmatprep.subr.mxu0 0.0
        %682 = vmatpush1.msra.mxu0 0.0
        %683 = vmatprep.subr.mxu0 0.0
        %684 = vmatpush1.msra.mxu0 0.0
        %685 = vmatprep.subr.mxu0 0.0
        %686 = vmatpush1.msra.mxu0 0.0
        %687 = vmatprep.subr.mxu0 0.0
        %688 = vmatpush1.msra.mxu0 0.0
        %689 = vmatprep.subr.mxu0 0.0
        %690 = vmatpush1.msra.mxu0 0.0
        %691 = vmatprep.subr.mxu0 0.0
        %692 = vmatpush1.msra.mxu0 0.0
        %693 = vmatprep.subr.mxu0 0.0
        %694 = vmatpush1.msra.mxu0 0.0
        %695 = vmatprep.subr.mxu0 0.0
        %696 = vmatpush1.msra.mxu0 0.0
        %697 = vmatprep.subr.mxu0 0.0
        %698 = vmatpush1.msra.mxu0 0.0
        %699 = vmatprep.subr.mxu0 0.0
        %700 = vmatpush1.msra.mxu0 0.0
        %701 = vmatprep.subr.mxu0 0.0
        %702 = vmatpush1.msra.mxu0 0.0
        %703 = vmatprep.subr.mxu0 0.0
        %704 = vmatpush1.msra.mxu0 0.0
        %705 = vmatprep.subr.mxu0 0.0
        %706 = vmatpush1.msra.mxu0 0.0
        %707 = vmatprep.subr.mxu0 0.0
        %708 = vmatpush1.msra.mxu0 0.0
        %709 = vmatprep.subr.mxu0 0.0
        %710 = vmatpush1.msra.mxu0 0.0
        %711 = vmatprep.mubr.f32.mxu0 0.0
        %712 = vmatmul.mubr.f32.gmra.mrb[0].mxu0 %v645
        %v713 = vpop.f32.mrb[0].mxu0
        %v714 = vadd.f32 %v641, %v713
        %v715 = vpop.f32.mrb[0].mxu0
        %716 = vdwg.mxu0
        %v717 = vld [vmem:[#allocation10] sm:$0xff]
        %v718 = vld [vmem:[#allocation10 + $0x8] sm:$0xff]
        %v719 = vld [vmem:[#allocation10 + $0x10] sm:$0xff]
        %v720 = vld [vmem:[#allocation10 + $0x18] sm:$0xff]
        %v721 = vld [vmem:[%s6] sm:$0x1]
        %v723 = vlaneseq
        %v724 = vshrl.u32 %v723, 7
        %v725 = vsub.s32 0, %v724
        %v726 = vrot.slane %v721, %v725
        %v729 = vsel %vm643, %v628, 0
        %v732 = vsel %vm643, %v629, 0
        %734 = vmatprep.subr.mxu0 0.0
        %735 = vmatpush1.msra.mxu0 %v717
        %736 = vmatprep.subr.mxu0 0.0
        %737 = vmatpush1.msra.mxu0 %v718
        %738 = vmatprep.subr.mxu0 0.0
        %739 = vmatpush1.msra.mxu0 %v719
        %740 = vmatprep.subr.mxu0 0.0
        %741 = vmatpush1.msra.mxu0 %v720
        %742 = vmatprep.subr.mxu0 0.0
        %743 = vmatpush1.msra.mxu0 0.0
        %744 = vmatprep.subr.mxu0 0.0
        %745 = vmatpush1.msra.mxu0 0.0
        %746 = vmatprep.subr.mxu0 0.0
        %747 = vmatpush1.msra.mxu0 0.0
        %748 = vmatprep.subr.mxu0 0.0
        %749 = vmatpush1.msra.mxu0 0.0
        %750 = vmatprep.subr.mxu0 0.0
        %751 = vmatpush1.msra.mxu0 0.0
        %752 = vmatprep.subr.mxu0 0.0
        %753 = vmatpush1.msra.mxu0 0.0
        %754 = vmatprep.subr.mxu0 0.0
        %755 = vmatpush1.msra.mxu0 0.0
        %756 = vmatprep.subr.mxu0 0.0
        %757 = vmatpush1.msra.mxu0 0.0
        %758 = vmatprep.subr.mxu0 0.0
        %759 = vmatpush1.msra.mxu0 0.0
        %760 = vmatprep.subr.mxu0 0.0
        %761 = vmatpush1.msra.mxu0 0.0
        %762 = vmatprep.subr.mxu0 0.0
        %763 = vmatpush1.msra.mxu0 0.0
        %764 = vmatprep.subr.mxu0 0.0
        %765 = vmatpush1.msra.mxu0 0.0
        %766 = vmatprep.subr.mxu0 0.0
        %767 = vmatpush1.msra.mxu0 0.0
        %768 = vmatprep.subr.mxu0 0.0
        %769 = vmatpush1.msra.mxu0 0.0
        %770 = vmatprep.subr.mxu0 0.0
        %771 = vmatpush1.msra.mxu0 0.0
        %772 = vmatprep.subr.mxu0 0.0
        %773 = vmatpush1.msra.mxu0 0.0
        %774 = vmatprep.subr.mxu0 0.0
        %775 = vmatpush1.msra.mxu0 0.0
        %776 = vmatprep.subr.mxu0 0.0
        %777 = vmatpush1.msra.mxu0 0.0
        %778 = vmatprep.subr.mxu0 0.0
        %779 = vmatpush1.msra.mxu0 0.0
        %780 = vmatprep.subr.mxu0 0.0
        %781 = vmatpush1.msra.mxu0 0.0
        %782 = vmatprep.subr.mxu0 0.0
        %783 = vmatpush1.msra.mxu0 0.0
        %784 = vmatprep.subr.mxu0 0.0
        %785 = vmatpush1.msra.mxu0 0.0
        %786 = vmatprep.subr.mxu0 0.0
        %787 = vmatpush1.msra.mxu0 0.0
        %788 = vmatprep.subr.mxu0 0.0
        %789 = vmatpush1.msra.mxu0 0.0
        %790 = vmatprep.subr.mxu0 0.0
        %791 = vmatpush1.msra.mxu0 0.0
        %792 = vmatprep.subr.mxu0 0.0
        %793 = vmatpush1.msra.mxu0 0.0
        %794 = vmatprep.subr.mxu0 0.0
        %795 = vmatpush1.msra.mxu0 0.0
        %796 = vmatprep.subr.mxu0 0.0
        %797 = vmatpush1.msra.mxu0 0.0
        %798 = vmatprep.mubr.f32.mxu0 0.0
        %799 = vmatmul.mubr.f32.gmra.mrb[0].mxu0 %v729
        %v800 = vpop.f32.mrb[0].mxu0
        %v801 = vadd.f32 %v726, %v800
        %v802 = vpop.f32.mrb[0].mxu0
        %803 = vmatprep.mubr.f32.mxu0 0.0
        %804 = vmatmul.mubr.f32.gmra.mrb[0].mxu0 %v732
        %v805 = vpop.f32.mrb[0].mxu0
        %v806 = vadd.f32 %v726, %v805
        %v807 = vpop.f32.mrb[0].mxu0
        %808 = vdwg.mxu0
        %v809 = vld [vmem:[#allocation11] sm:$0xff]
        %v810 = vld [vmem:[#allocation11 + $0x8] sm:$0xff]
        %v811 = vld [vmem:[#allocation11 + $0x10] sm:$0xff]
        %v812 = vld [vmem:[#allocation11 + $0x18] sm:$0xff]
        %v813 = vld [vmem:[#allocation13] sm:$0x1]
        %v815 = vlaneseq
        %v816 = vshrl.u32 %v815, 7
        %v817 = vsub.s32 0, %v816
        %v818 = vrot.slane %v813, %v817
        %v821 = vsel %vm643, %v630, 0
        %v824 = vsel %vm643, %v631, 0
        %826 = vmatprep.subr.mxu0 0.0
        %827 = vmatpush1.msra.mxu0 %v809
        %828 = vmatprep.subr.mxu0 0.0
        %829 = vmatpush1.msra.mxu0 %v810
        %830 = vmatprep.subr.mxu0 0.0
        %831 = vmatpush1.msra.mxu0 %v811
        %832 = vmatprep.subr.mxu0 0.0
        %833 = vmatpush1.msra.mxu0 %v812
        %834 = vmatprep.subr.mxu0 0.0
        %835 = vmatpush1.msra.mxu0 0.0
        %836 = vmatprep.subr.mxu0 0.0
        %837 = vmatpush1.msra.mxu0 0.0
        %838 = vmatprep.subr.mxu0 0.0
        %839 = vmatpush1.msra.mxu0 0.0
        %840 = vmatprep.subr.mxu0 0.0
        %841 = vmatpush1.msra.mxu0 0.0
        %842 = vmatprep.subr.mxu0 0.0
        %843 = vmatpush1.msra.mxu0 0.0
        %844 = vmatprep.subr.mxu0 0.0
        %845 = vmatpush1.msra.mxu0 0.0
        %846 = vmatprep.subr.mxu0 0.0
        %847 = vmatpush1.msra.mxu0 0.0
        %848 = vmatprep.subr.mxu0 0.0
        %849 = vmatpush1.msra.mxu0 0.0
        %850 = vmatprep.subr.mxu0 0.0
        %851 = vmatpush1.msra.mxu0 0.0
        %852 = vmatprep.subr.mxu0 0.0
        %853 = vmatpush1.msra.mxu0 0.0
        %854 = vmatprep.subr.mxu0 0.0
        %855 = vmatpush1.msra.mxu0 0.0
        %856 = vmatprep.subr.mxu0 0.0
        %857 = vmatpush1.msra.mxu0 0.0
        %858 = vmatprep.subr.mxu0 0.0
        %859 = vmatpush1.msra.mxu0 0.0
        %860 = vmatprep.subr.mxu0 0.0
        %861 = vmatpush1.msra.mxu0 0.0
        %862 = vmatprep.subr.mxu0 0.0
        %863 = vmatpush1.msra.mxu0 0.0
        %864 = vmatprep.subr.mxu0 0.0
        %865 = vmatpush1.msra.mxu0 0.0
        %866 = vmatprep.subr.mxu0 0.0
        %867 = vmatpush1.msra.mxu0 0.0
        %868 = vmatprep.subr.mxu0 0.0
        %869 = vmatpush1.msra.mxu0 0.0
        %870 = vmatprep.subr.mxu0 0.0
        %871 = vmatpush1.msra.mxu0 0.0
        %872 = vmatprep.subr.mxu0 0.0
        %873 = vmatpush1.msra.mxu0 0.0
        %874 = vmatprep.subr.mxu0 0.0
        %875 = vmatpush1.msra.mxu0 0.0
        %876 = vmatprep.subr.mxu0 0.0
        %877 = vmatpush1.msra.mxu0 0.0
        %878 = vmatprep.subr.mxu0 0.0
        %879 = vmatpush1.msra.mxu0 0.0
        %880 = vmatprep.subr.mxu0 0.0
        %881 = vmatpush1.msra.mxu0 0.0
        %882 = vmatprep.subr.mxu0 0.0
        %883 = vmatpush1.msra.mxu0 0.0
        %884 = vmatprep.subr.mxu0 0.0
        %885 = vmatpush1.msra.mxu0 0.0
        %886 = vmatprep.subr.mxu0 0.0
        %887 = vmatpush1.msra.mxu0 0.0
        %888 = vmatprep.subr.mxu0 0.0
        %889 = vmatpush1.msra.mxu0 0.0
        %890 = vmatprep.mubr.f32.mxu0 0.0
        %891 = vmatmul.mubr.f32.gmra.mrb[0].mxu0 %v821
        %v892 = vpop.f32.mrb[0].mxu0
        %v893 = vadd.f32 %v818, %v892
        %v894 = vpop.f32.mrb[0].mxu0
        %895 = vmatprep.mubr.f32.mxu0 0.0
        %896 = vmatmul.mubr.f32.gmra.mrb[0].mxu0 %v824
        %v897 = vpop.f32.mrb[0].mxu0
        %v898 = vadd.f32 %v818, %v897
        %v899 = vpop.f32.mrb[0].mxu0
        %900 = vdwg.mxu0
        %vm901 = vcmask 64512
        %v903 = vsel %vm901, %v714, 0
        %v906 = vsel %vm901, %v801, 0
        %v909 = vsel %vm901, %v806, 0
        %911 = vmatprep.subr.mxu0 0.0
        %912 = vmatpush1.xpose.msra.mxu0 %v906
        %913 = vmatprep.subr.mxu0 0.0
        %914 = vmatpush1.xpose.msra.mxu0 %v909
        %915 = vmatprep.subr.mxu0 0.0
        %916 = vmatpush1.xpose.msra.mxu0 0.0
        %917 = vmatprep.subr.mxu0 0.0
        %918 = vmatpush1.xpose.msra.mxu0 0.0
        %919 = vmatprep.subr.mxu0 0.0
        %920 = vmatpush1.xpose.msra.mxu0 0.0
        %921 = vmatprep.subr.mxu0 0.0
        %922 = vmatpush1.xpose.msra.mxu0 0.0
        %923 = vmatprep.subr.mxu0 0.0
        %924 = vmatpush1.xpose.msra.mxu0 0.0
        %925 = vmatprep.subr.mxu0 0.0
        %926 = vmatpush1.xpose.msra.mxu0 0.0
        %927 = vmatprep.subr.mxu0 0.0
        %928 = vmatpush1.xpose.msra.mxu0 0.0
        %929 = vmatprep.subr.mxu0 0.0
        %930 = vmatpush1.xpose.msra.mxu0 0.0
        %931 = vmatprep.subr.mxu0 0.0
        %932 = vmatpush1.xpose.msra.mxu0 0.0
        %933 = vmatprep.subr.mxu0 0.0
        %934 = vmatpush1.xpose.msra.mxu0 0.0
        %935 = vmatprep.subr.mxu0 0.0
        %936 = vmatpush1.xpose.msra.mxu0 0.0
        %937 = vmatprep.subr.mxu0 0.0
        %938 = vmatpush1.xpose.msra.mxu0 0.0
        %939 = vmatprep.subr.mxu0 0.0
        %940 = vmatpush1.xpose.msra.mxu0 0.0
        %941 = vmatprep.subr.mxu0 0.0
        %942 = vmatpush1.xpose.msra.mxu0 0.0
        %943 = vmatprep.subr.mxu0 0.0
        %944 = vmatpush1.xpose.msra.mxu0 0.0
        %945 = vmatprep.subr.mxu0 0.0
        %946 = vmatpush1.xpose.msra.mxu0 0.0
        %947 = vmatprep.subr.mxu0 0.0
        %948 = vmatpush1.xpose.msra.mxu0 0.0
        %949 = vmatprep.subr.mxu0 0.0
        %950 = vmatpush1.xpose.msra.mxu0 0.0
        %951 = vmatprep.subr.mxu0 0.0
        %952 = vmatpush1.xpose.msra.mxu0 0.0
        %953 = vmatprep.subr.mxu0 0.0
        %954 = vmatpush1.xpose.msra.mxu0 0.0
        %955 = vmatprep.subr.mxu0 0.0
        %956 = vmatpush1.xpose.msra.mxu0 0.0
        %957 = vmatprep.subr.mxu0 0.0
        %958 = vmatpush1.xpose.msra.mxu0 0.0
        %959 = vmatprep.subr.mxu0 0.0
        %960 = vmatpush1.xpose.msra.mxu0 0.0
        %961 = vmatprep.subr.mxu0 0.0
        %962 = vmatpush1.xpose.msra.mxu0 0.0
        %963 = vmatprep.subr.mxu0 0.0
        %964 = vmatpush1.xpose.msra.mxu0 0.0
        %965 = vmatprep.subr.mxu0 0.0
        %966 = vmatpush1.xpose.msra.mxu0 0.0
        %967 = vmatprep.subr.mxu0 0.0
        %968 = vmatpush1.xpose.msra.mxu0 0.0
        %969 = vmatprep.subr.mxu0 0.0
        %970 = vmatpush1.xpose.msra.mxu0 0.0
        %971 = vmatprep.subr.mxu0 0.0
        %972 = vmatpush1.xpose.msra.mxu0 0.0
        %973 = vmatprep.subr.mxu0 0.0
        %974 = vmatpush1.xpose.msra.mxu0 0.0
        %975 = vmatprep.mubr.f32.mxu0 0.0
        %976 = vmatmul.mubr.f32.gmra.mrb[0].mxu0 %v903
        %v977 = vpop.f32.mrb[0].mxu0
        %v978 = vadd.f32 0.0, %v977
        %v979 = vpop.f32.mrb[0].mxu0
        %980 = vdwg.mxu0
        %v981 = vmul.f32 %v978, 0.35355338
        %vm982 = vcmask 130048
        %v983 = vsel %vm982, %v981, -inf
        %984 = vmax.xlane.f32.xlu0 %v983
        %v985 = vpop.xlane.xlu0 %984
        %v986 = vsub.f32 %v981, %v985
        %v987 = vmul.f32 %v986, 1.442695
        %v988 = vpow.pop %v987
        %v989 = vsel %vm982, %v988, 0.0
        %990 = vadd.xlane.f32.xlu0 %v989
        %v991 = vpop.xlane.xlu0 %990
        %v992 = vrcp.pop %v991
        %v993 = vmul.f32 %v988, %v992
        %994 = vst.msk [vmem:[%s626] sm:$0xff] %vm982, %v993
        %v996 = vsel %vm982, %v993, 0
        %998 = vmatprep.subr.mxu0 0.0
        %999 = vmatpush1.msra.mxu0 %v893
        %1000 = vmatprep.subr.mxu0 0.0
        %1001 = vmatpush1.msra.mxu0 %v898
        %1002 = vmatprep.subr.mxu0 0.0
        %1003 = vmatpush1.msra.mxu0 0.0
        %1004 = vmatprep.subr.mxu0 0.0
        %1005 = vmatpush1.msra.mxu0 0.0
        %1006 = vmatprep.subr.mxu0 0.0
        %1007 = vmatpush1.msra.mxu0 0.0
        %1008 = vmatprep.subr.mxu0 0.0
        %1009 = vmatpush1.msra.mxu0 0.0
        %1010 = vmatprep.subr.mxu0 0.0
        %1011 = vmatpush1.msra.mxu0 0.0
        %1012 = vmatprep.subr.mxu0 0.0
        %1013 = vmatpush1.msra.mxu0 0.0
        %1014 = vmatprep.subr.mxu0 0.0
        %1015 = vmatpush1.msra.mxu0 0.0
        %1016 = vmatprep.subr.mxu0 0.0
        %1017 = vmatpush1.msra.mxu0 0.0
        %1018 = vmatprep.subr.mxu0 0.0
        %1019 = vmatpush1.msra.mxu0 0.0
        %1020 = vmatprep.subr.mxu0 0.0
        %1021 = vmatpush1.msra.mxu0 0.0
        %1022 = vmatprep.subr.mxu0 0.0
        %1023 = vmatpush1.msra.mxu0 0.0
        %1024 = vmatprep.subr.mxu0 0.0
        %1025 = vmatpush1.msra.mxu0 0.0
        %1026 = vmatprep.subr.mxu0 0.0
        %1027 = vmatpush1.msra.mxu0 0.0
        %1028 = vmatprep.subr.mxu0 0.0
        %1029 = vmatpush1.msra.mxu0 0.0
        %1030 = vmatprep.subr.mxu0 0.0
        %1031 = vmatpush1.msra.mxu0 0.0
        %1032 = vmatprep.subr.mxu0 0.0
        %1033 = vmatpush1.msra.mxu0 0.0
        %1034 = vmatprep.subr.mxu0 0.0
        %1035 = vmatpush1.msra.mxu0 0.0
        %1036 = vmatprep.subr.mxu0 0.0
        %1037 = vmatpush1.msra.mxu0 0.0
        %1038 = vmatprep.subr.mxu0 0.0
        %1039 = vmatpush1.msra.mxu0 0.0
        %1040 = vmatprep.subr.mxu0 0.0
        %1041 = vmatpush1.msra.mxu0 0.0
        %1042 = vmatprep.subr.mxu0 0.0
        %1043 = vmatpush1.msra.mxu0 0.0
        %1044 = vmatprep.subr.mxu0 0.0
        %1045 = vmatpush1.msra.mxu0 0.0
        %1046 = vmatprep.subr.mxu0 0.0
        %1047 = vmatpush1.msra.mxu0 0.0
        %1048 = vmatprep.subr.mxu0 0.0
        %1049 = vmatpush1.msra.mxu0 0.0
        %1050 = vmatprep.subr.mxu0 0.0
        %1051 = vmatpush1.msra.mxu0 0.0
        %1052 = vmatprep.subr.mxu0 0.0
        %1053 = vmatpush1.msra.mxu0 0.0
        %1054 = vmatprep.subr.mxu0 0.0
        %1055 = vmatpush1.msra.mxu0 0.0
        %1056 = vmatprep.subr.mxu0 0.0
        %1057 = vmatpush1.msra.mxu0 0.0
        %1058 = vmatprep.subr.mxu0 0.0
        %1059 = vmatpush1.msra.mxu0 0.0
        %1060 = vmatprep.subr.mxu0 0.0
        %1061 = vmatpush1.msra.mxu0 0.0
        %1062 = vmatprep.mubr.f32.mxu0 0.0
        %1063 = vmatmul.mubr.f32.gmra.mrb[0].mxu0 %v996
        %v1064 = vpop.f32.mrb[0].mxu0
        %v1065 = vadd.f32 0.0, %v1064
        %v1066 = vpop.f32.mrb[0].mxu0
        %1067 = vdwg.mxu0
        %1068 = vrot.lane.b32.xlu0 %v714, 120
        %v1069 = vpop.permute.xlu0 %1068
        %1070 = vrot.lane.b32.xlu0 %v801, 120
        %v1071 = vpop.permute.xlu0 %1070
        %1072 = vrot.lane.b32.xlu0 %v806, 120
        %v1073 = vpop.permute.xlu0 %1072
        %v1074 = vsel %vm901, %v1069, 0
        %v1076 = vsel %vm901, %v1071, 0
        %v1078 = vsel %vm901, %v1073, 0
        %1080 = vmatprep.subr.mxu0 0.0
        %1081 = vmatpush1.xpose.msra.mxu0 %v1076
        %1082 = vmatprep.subr.mxu0 0.0
        %1083 = vmatpush1.xpose.msra.mxu0 %v1078
        %1084 = vmatprep.subr.mxu0 0.0
        %1085 = vmatpush1.xpose.msra.mxu0 0.0
        %1086 = vmatprep.subr.mxu0 0.0
        %1087 = vmatpush1.xpose.msra.mxu0 0.0
        %1088 = vmatprep.subr.mxu0 0.0
        %1089 = vmatpush1.xpose.msra.mxu0 0.0
        %1090 = vmatprep.subr.mxu0 0.0
        %1091 = vmatpush1.xpose.msra.mxu0 0.0
        %1092 = vmatprep.subr.mxu0 0.0
        %1093 = vmatpush1.xpose.msra.mxu0 0.0
        %1094 = vmatprep.subr.mxu0 0.0
        %1095 = vmatpush1.xpose.msra.mxu0 0.0
        %1096 = vmatprep.subr.mxu0 0.0
        %1097 = vmatpush1.xpose.msra.mxu0 0.0
        %1098 = vmatprep.subr.mxu0 0.0
        %1099 = vmatpush1.xpose.msra.mxu0 0.0
        %1100 = vmatprep.subr.mxu0 0.0
        %1101 = vmatpush1.xpose.msra.mxu0 0.0
        %1102 = vmatprep.subr.mxu0 0.0
        %1103 = vmatpush1.xpose.msra.mxu0 0.0
        %1104 = vmatprep.subr.mxu0 0.0
        %1105 = vmatpush1.xpose.msra.mxu0 0.0
        %1106 = vmatprep.subr.mxu0 0.0
        %1107 = vmatpush1.xpose.msra.mxu0 0.0
        %1108 = vmatprep.subr.mxu0 0.0
        %1109 = vmatpush1.xpose.msra.mxu0 0.0
        %1110 = vmatprep.subr.mxu0 0.0
        %1111 = vmatpush1.xpose.msra.mxu0 0.0
        %1112 = vmatprep.subr.mxu0 0.0
        %1113 = vmatpush1.xpose.msra.mxu0 0.0
        %1114 = vmatprep.subr.mxu0 0.0
        %1115 = vmatpush1.xpose.msra.mxu0 0.0
        %1116 = vmatprep.subr.mxu0 0.0
        %1117 = vmatpush1.xpose.msra.mxu0 0.0
        %1118 = vmatprep.subr.mxu0 0.0
        %1119 = vmatpush1.xpose.msra.mxu0 0.0
        %1120 = vmatprep.subr.mxu0 0.0
        %1121 = vmatpush1.xpose.msra.mxu0 0.0
        %1122 = vmatprep.subr.mxu0 0.0
        %1123 = vmatpush1.xpose.msra.mxu0 0.0
        %1124 = vmatprep.subr.mxu0 0.0
        %1125 = vmatpush1.xpose.msra.mxu0 0.0
        %1126 = vmatprep.subr.mxu0 0.0
        %1127 = vmatpush1.xpose.msra.mxu0 0.0
        %1128 = vmatprep.subr.mxu0 0.0
        %1129 = vmatpush1.xpose.msra.mxu0 0.0
        %1130 = vmatprep.subr.mxu0 0.0
        %1131 = vmatpush1.xpose.msra.mxu0 0.0
        %1132 = vmatprep.subr.mxu0 0.0
        %1133 = vmatpush1.xpose.msra.mxu0 0.0
        %1134 = vmatprep.subr.mxu0 0.0
        %1135 = vmatpush1.xpose.msra.mxu0 0.0
        %1136 = vmatprep.subr.mxu0 0.0
        %1137 = vmatpush1.xpose.msra.mxu0 0.0
        %1138 = vmatprep.subr.mxu0 0.0
        %1139 = vmatpush1.xpose.msra.mxu0 0.0
        %1140 = vmatprep.subr.mxu0 0.0
        %1141 = vmatpush1.xpose.msra.mxu0 0.0
        %1142 = vmatprep.subr.mxu0 0.0
        %1143 = vmatpush1.xpose.msra.mxu0 0.0
        %1144 = vmatprep.mubr.f32.mxu0 0.0
        %1145 = vmatmul.mubr.f32.gmra.mrb[0].mxu0 %v1074
        %v1146 = vpop.f32.mrb[0].mxu0
        %v1147 = vadd.f32 0.0, %v1146
        %v1148 = vpop.f32.mrb[0].mxu0
        %1149 = vdwg.mxu0
        %v1150 = vmul.f32 %v1147, 0.35355338
        %v1151 = vsel %vm982, %v1150, -inf
        %1152 = vmax.xlane.f32.xlu0 %v1151
        %v1153 = vpop.xlane.xlu0 %1152
        %v1154 = vsub.f32 %v1150, %v1153
        %v1155 = vmul.f32 %v1154, 1.442695
        %v1156 = vpow.pop %v1155
        %v1157 = vsel %vm982, %v1156, 0.0
        %1158 = vadd.xlane.f32.xlu0 %v1157
        %v1159 = vpop.xlane.xlu0 %1158
        %v1160 = vrcp.pop %v1159
        %v1161 = vmul.f32 %v1156, %v1160
        %s1162 = scalar_lea.vmem %s626, 8 [#allocation15]
        %1163 = vst.msk [vmem:[%s1162] sm:$0xff] %vm982, %v1161
        %1166 = vrot.lane.b32.xlu0 %v893, 120
        %v1167 = vpop.permute.xlu0 %1166
        %1168 = vrot.lane.b32.xlu0 %v898, 120
        %v1169 = vpop.permute.xlu0 %1168
        %v1173 = vsel %vm982, %v1161, 0
        %1175 = vmatprep.subr.mxu0 0.0
        %1176 = vmatpush1.msra.mxu0 %v1167
        %1177 = vmatprep.subr.mxu0 0.0
        %1178 = vmatpush1.msra.mxu0 %v1169
        %1179 = vmatprep.subr.mxu0 0.0
        %1180 = vmatpush1.msra.mxu0 0.0
        %1181 = vmatprep.subr.mxu0 0.0
        %1182 = vmatpush1.msra.mxu0 0.0
        %1183 = vmatprep.subr.mxu0 0.0
        %1184 = vmatpush1.msra.mxu0 0.0
        %1185 = vmatprep.subr.mxu0 0.0
        %1186 = vmatpush1.msra.mxu0 0.0
        %1187 = vmatprep.subr.mxu0 0.0
        %1188 = vmatpush1.msra.mxu0 0.0
        %1189 = vmatprep.subr.mxu0 0.0
        %1190 = vmatpush1.msra.mxu0 0.0
        %1191 = vmatprep.subr.mxu0 0.0
        %1192 = vmatpush1.msra.mxu0 0.0
        %1193 = vmatprep.subr.mxu0 0.0
        %1194 = vmatpush1.msra.mxu0 0.0
        %1195 = vmatprep.subr.mxu0 0.0
        %1196 = vmatpush1.msra.mxu0 0.0
        %1197 = vmatprep.subr.mxu0 0.0
        %1198 = vmatpush1.msra.mxu0 0.0
        %1199 = vmatprep.subr.mxu0 0.0
        %1200 = vmatpush1.msra.mxu0 0.0
        %1201 = vmatprep.subr.mxu0 0.0
        %1202 = vmatpush1.msra.mxu0 0.0
        %1203 = vmatprep.subr.mxu0 0.0
        %1204 = vmatpush1.msra.mxu0 0.0
        %1205 = vmatprep.subr.mxu0 0.0
        %1206 = vmatpush1.msra.mxu0 0.0
        %1207 = vmatprep.subr.mxu0 0.0
        %1208 = vmatpush1.msra.mxu0 0.0
        %1209 = vmatprep.subr.mxu0 0.0
        %1210 = vmatpush1.msra.mxu0 0.0
        %1211 = vmatprep.subr.mxu0 0.0
        %1212 = vmatpush1.msra.mxu0 0.0
        %1213 = vmatprep.subr.mxu0 0.0
        %1214 = vmatpush1.msra.mxu0 0.0
        %1215 = vmatprep.subr.mxu0 0.0
        %1216 = vmatpush1.msra.mxu0 0.0
        %1217 = vmatprep.subr.mxu0 0.0
        %1218 = vmatpush1.msra.mxu0 0.0
        %1219 = vmatprep.subr.mxu0 0.0
        %1220 = vmatpush1.msra.mxu0 0.0
        %1221 = vmatprep.subr.mxu0 0.0
        %1222 = vmatpush1.msra.mxu0 0.0
        %1223 = vmatprep.subr.mxu0 0.0
        %1224 = vmatpush1.msra.mxu0 0.0
        %1225 = vmatprep.subr.mxu0 0.0
        %1226 = vmatpush1.msra.mxu0 0.0
        %1227 = vmatprep.subr.mxu0 0.0
        %1228 = vmatpush1.msra.mxu0 0.0
        %1229 = vmatprep.subr.mxu0 0.0
        %1230 = vmatpush1.msra.mxu0 0.0
        %1231 = vmatprep.subr.mxu0 0.0
        %1232 = vmatpush1.msra.mxu0 0.0
        %1233 = vmatprep.subr.mxu0 0.0
        %1234 = vmatpush1.msra.mxu0 0.0
        %1235 = vmatprep.subr.mxu0 0.0
        %1236 = vmatpush1.msra.mxu0 0.0
        %1237 = vmatprep.subr.mxu0 0.0
        %1238 = vmatpush1.msra.mxu0 0.0
        %1239 = vmatprep.mubr.f32.mxu0 0.0
        %1240 = vmatmul.mubr.f32.gmra.mrb[0].mxu0 %v1173
        %v1241 = vpop.f32.mrb[0].mxu0
        %v1242 = vadd.f32 0.0, %v1241
        %v1243 = vpop.f32.mrb[0].mxu0
        %1244 = vdwg.mxu0
        %1245 = vrot.lane.b32.xlu0 %v714, 112
        %v1246 = vpop.permute.xlu0 %1245
        %1247 = vrot.lane.b32.xlu0 %v801, 112
        %v1248 = vpop.permute.xlu0 %1247
        %1249 = vrot.lane.b32.xlu0 %v806, 112
        %v1250 = vpop.permute.xlu0 %1249
        %v1251 = vsel %vm901, %v1246, 0
        %v1253 = vsel %vm901, %v1248, 0
        %v1255 = vsel %vm901, %v1250, 0
        %1257 = vmatprep.subr.mxu0 0.0
        %1258 = vmatpush1.xpose.msra.mxu0 %v1253
        %1259 = vmatprep.subr.mxu0 0.0
        %1260 = vmatpush1.xpose.msra.mxu0 %v1255
        %1261 = vmatprep.subr.mxu0 0.0
        %1262 = vmatpush1.xpose.msra.mxu0 0.0
        %1263 = vmatprep.subr.mxu0 0.0
        %1264 = vmatpush1.xpose.msra.mxu0 0.0
        %1265 = vmatprep.subr.mxu0 0.0
        %1266 = vmatpush1.xpose.msra.mxu0 0.0
        %1267 = vmatprep.subr.mxu0 0.0
        %1268 = vmatpush1.xpose.msra.mxu0 0.0
        %1269 = vmatprep.subr.mxu0 0.0
        %1270 = vmatpush1.xpose.msra.mxu0 0.0
        %1271 = vmatprep.subr.mxu0 0.0
        %1272 = vmatpush1.xpose.msra.mxu0 0.0
        %1273 = vmatprep.subr.mxu0 0.0
        %1274 = vmatpush1.xpose.msra.mxu0 0.0
        %1275 = vmatprep.subr.mxu0 0.0
        %1276 = vmatpush1.xpose.msra.mxu0 0.0
        %1277 = vmatprep.subr.mxu0 0.0
        %1278 = vmatpush1.xpose.msra.mxu0 0.0
        %1279 = vmatprep.subr.mxu0 0.0
        %1280 = vmatpush1.xpose.msra.mxu0 0.0
        %1281 = vmatprep.subr.mxu0 0.0
        %1282 = vmatpush1.xpose.msra.mxu0 0.0
        %1283 = vmatprep.subr.mxu0 0.0
        %1284 = vmatpush1.xpose.msra.mxu0 0.0
        %1285 = vmatprep.subr.mxu0 0.0
        %1286 = vmatpush1.xpose.msra.mxu0 0.0
        %1287 = vmatprep.subr.mxu0 0.0
        %1288 = vmatpush1.xpose.msra.mxu0 0.0
        %1289 = vmatprep.subr.mxu0 0.0
        %1290 = vmatpush1.xpose.msra.mxu0 0.0
        %1291 = vmatprep.subr.mxu0 0.0
        %1292 = vmatpush1.xpose.msra.mxu0 0.0
        %1293 = vmatprep.subr.mxu0 0.0
        %1294 = vmatpush1.xpose.msra.mxu0 0.0
        %1295 = vmatprep.subr.mxu0 0.0
        %1296 = vmatpush1.xpose.msra.mxu0 0.0
        %1297 = vmatprep.subr.mxu0 0.0
        %1298 = vmatpush1.xpose.msra.mxu0 0.0
        %1299 = vmatprep.subr.mxu0 0.0
        %1300 = vmatpush1.xpose.msra.mxu0 0.0
        %1301 = vmatprep.subr.mxu0 0.0
        %1302 = vmatpush1.xpose.msra.mxu0 0.0
        %1303 = vmatprep.subr.mxu0 0.0
        %1304 = vmatpush1.xpose.msra.mxu0 0.0
        %1305 = vmatprep.subr.mxu0 0.0
        %1306 = vmatpush1.xpose.msra.mxu0 0.0
        %1307 = vmatprep.subr.mxu0 0.0
        %1308 = vmatpush1.xpose.msra.mxu0 0.0
        %1309 = vmatprep.subr.mxu0 0.0
        %1310 = vmatpush1.xpose.msra.mxu0 0.0
        %1311 = vmatprep.subr.mxu0 0.0
        %1312 = vmatpush1.xpose.msra.mxu0 0.0
        %1313 = vmatprep.subr.mxu0 0.0
        %1314 = vmatpush1.xpose.msra.mxu0 0.0
        %1315 = vmatprep.subr.mxu0 0.0
        %1316 = vmatpush1.xpose.msra.mxu0 0.0
        %1317 = vmatprep.subr.mxu0 0.0
        %1318 = vmatpush1.xpose.msra.mxu0 0.0
        %1319 = vmatprep.subr.mxu0 0.0
        %1320 = vmatpush1.xpose.msra.mxu0 0.0
        %1321 = vmatprep.mubr.f32.mxu0 0.0
        %1322 = vmatmul.mubr.f32.gmra.mrb[0].mxu0 %v1251
        %v1323 = vpop.f32.mrb[0].mxu0
        %v1324 = vadd.f32 0.0, %v1323
        %v1325 = vpop.f32.mrb[0].mxu0
        %1326 = vdwg.mxu0
        %v1327 = vmul.f32 %v1324, 0.35355338
        %v1328 = vsel %vm982, %v1327, -inf
        %1329 = vmax.xlane.f32.xlu0 %v1328
        %v1330 = vpop.xlane.xlu0 %1329
        %v1331 = vsub.f32 %v1327, %v1330
        %v1332 = vmul.f32 %v1331, 1.442695
        %v1333 = vpow.pop %v1332
        %v1334 = vsel %vm982, %v1333, 0.0
        %1335 = vadd.xlane.f32.xlu0 %v1334
        %v1336 = vpop.xlane.xlu0 %1335
        %v1337 = vrcp.pop %v1336
        %v1338 = vmul.f32 %v1333, %v1337
        %s1339 = scalar_lea.vmem %s626, 16 [#allocation15]
        %1340 = vst.msk [vmem:[%s1339] sm:$0xff] %vm982, %v1338
        %1341 = vrot.lane.b32.xlu0 %v893, 112
        %v1342 = vpop.permute.xlu0 %1341
        %1343 = vrot.lane.b32.xlu0 %v898, 112
        %v1344 = vpop.permute.xlu0 %1343
        %v1348 = vsel %vm982, %v1338, 0
        %1350 = vmatprep.subr.mxu0 0.0
        %1351 = vmatpush1.msra.mxu0 %v1342
        %1352 = vmatprep.subr.mxu0 0.0
        %1353 = vmatpush1.msra.mxu0 %v1344
        %1354 = vmatprep.subr.mxu0 0.0
        %1355 = vmatpush1.msra.mxu0 0.0
        %1356 = vmatprep.subr.mxu0 0.0
        %1357 = vmatpush1.msra.mxu0 0.0
        %1358 = vmatprep.subr.mxu0 0.0
        %1359 = vmatpush1.msra.mxu0 0.0
        %1360 = vmatprep.subr.mxu0 0.0
        %1361 = vmatpush1.msra.mxu0 0.0
        %1362 = vmatprep.subr.mxu0 0.0
        %1363 = vmatpush1.msra.mxu0 0.0
        %1364 = vmatprep.subr.mxu0 0.0
        %1365 = vmatpush1.msra.mxu0 0.0
        %1366 = vmatprep.subr.mxu0 0.0
        %1367 = vmatpush1.msra.mxu0 0.0
        %1368 = vmatprep.subr.mxu0 0.0
        %1369 = vmatpush1.msra.mxu0 0.0
        %1370 = vmatprep.subr.mxu0 0.0
        %1371 = vmatpush1.msra.mxu0 0.0
        %1372 = vmatprep.subr.mxu0 0.0
        %1373 = vmatpush1.msra.mxu0 0.0
        %1374 = vmatprep.subr.mxu0 0.0
        %1375 = vmatpush1.msra.mxu0 0.0
        %1376 = vmatprep.subr.mxu0 0.0
        %1377 = vmatpush1.msra.mxu0 0.0
        %1378 = vmatprep.subr.mxu0 0.0
        %1379 = vmatpush1.msra.mxu0 0.0
        %1380 = vmatprep.subr.mxu0 0.0
        %1381 = vmatpush1.msra.mxu0 0.0
        %1382 = vmatprep.subr.mxu0 0.0
        %1383 = vmatpush1.msra.mxu0 0.0
        %1384 = vmatprep.subr.mxu0 0.0
        %1385 = vmatpush1.msra.mxu0 0.0
        %1386 = vmatprep.subr.mxu0 0.0
        %1387 = vmatpush1.msra.mxu0 0.0
        %1388 = vmatprep.subr.mxu0 0.0
        %1389 = vmatpush1.msra.mxu0 0.0
        %1390 = vmatprep.subr.mxu0 0.0
        %1391 = vmatpush1.msra.mxu0 0.0
        %1392 = vmatprep.subr.mxu0 0.0
        %1393 = vmatpush1.msra.mxu0 0.0
        %1394 = vmatprep.subr.mxu0 0.0
        %1395 = vmatpush1.msra.mxu0 0.0
        %1396 = vmatprep.subr.mxu0 0.0
        %1397 = vmatpush1.msra.mxu0 0.0
        %1398 = vmatprep.subr.mxu0 0.0
        %1399 = vmatpush1.msra.mxu0 0.0
        %1400 = vmatprep.subr.mxu0 0.0
        %1401 = vmatpush1.msra.mxu0 0.0
        %1402 = vmatprep.subr.mxu0 0.0
        %1403 = vmatpush1.msra.mxu0 0.0
        %1404 = vmatprep.subr.mxu0 0.0
        %1405 = vmatpush1.msra.mxu0 0.0
        %1406 = vmatprep.subr.mxu0 0.0
        %1407 = vmatpush1.msra.mxu0 0.0
        %1408 = vmatprep.subr.mxu0 0.0
        %1409 = vmatpush1.msra.mxu0 0.0
        %1410 = vmatprep.subr.mxu0 0.0
        %1411 = vmatpush1.msra.mxu0 0.0
        %1412 = vmatprep.subr.mxu0 0.0
        %1413 = vmatpush1.msra.mxu0 0.0
        %1414 = vmatprep.mubr.f32.mxu0 0.0
        %1415 = vmatmul.mubr.f32.gmra.mrb[0].mxu0 %v1348
        %v1416 = vpop.f32.mrb[0].mxu0
        %v1417 = vadd.f32 0.0, %v1416
        %v1418 = vpop.f32.mrb[0].mxu0
        %1419 = vdwg.mxu0
        %1420 = vrot.lane.b32.xlu0 %v714, 104
        %v1421 = vpop.permute.xlu0 %1420
        %1422 = vrot.lane.b32.xlu0 %v801, 104
        %v1423 = vpop.permute.xlu0 %1422
        %1424 = vrot.lane.b32.xlu0 %v806, 104
        %v1425 = vpop.permute.xlu0 %1424
        %v1426 = vsel %vm901, %v1421, 0
        %v1428 = vsel %vm901, %v1423, 0
        %v1430 = vsel %vm901, %v1425, 0
        %1432 = vmatprep.subr.mxu0 0.0
        %1433 = vmatpush1.xpose.msra.mxu0 %v1428
        %1434 = vmatprep.subr.mxu0 0.0
        %1435 = vmatpush1.xpose.msra.mxu0 %v1430
        %1436 = vmatprep.subr.mxu0 0.0
        %1437 = vmatpush1.xpose.msra.mxu0 0.0
        %1438 = vmatprep.subr.mxu0 0.0
        %1439 = vmatpush1.xpose.msra.mxu0 0.0
        %1440 = vmatprep.subr.mxu0 0.0
        %1441 = vmatpush1.xpose.msra.mxu0 0.0
        %1442 = vmatprep.subr.mxu0 0.0
        %1443 = vmatpush1.xpose.msra.mxu0 0.0
        %1444 = vmatprep.subr.mxu0 0.0
        %1445 = vmatpush1.xpose.msra.mxu0 0.0
        %1446 = vmatprep.subr.mxu0 0.0
        %1447 = vmatpush1.xpose.msra.mxu0 0.0
        %1448 = vmatprep.subr.mxu0 0.0
        %1449 = vmatpush1.xpose.msra.mxu0 0.0
        %1450 = vmatprep.subr.mxu0 0.0
        %1451 = vmatpush1.xpose.msra.mxu0 0.0
        %1452 = vmatprep.subr.mxu0 0.0
        %1453 = vmatpush1.xpose.msra.mxu0 0.0
        %1454 = vmatprep.subr.mxu0 0.0
        %1455 = vmatpush1.xpose.msra.mxu0 0.0
        %1456 = vmatprep.subr.mxu0 0.0
        %1457 = vmatpush1.xpose.msra.mxu0 0.0
        %1458 = vmatprep.subr.mxu0 0.0
        %1459 = vmatpush1.xpose.msra.mxu0 0.0
        %1460 = vmatprep.subr.mxu0 0.0
        %1461 = vmatpush1.xpose.msra.mxu0 0.0
        %1462 = vmatprep.subr.mxu0 0.0
        %1463 = vmatpush1.xpose.msra.mxu0 0.0
        %1464 = vmatprep.subr.mxu0 0.0
        %1465 = vmatpush1.xpose.msra.mxu0 0.0
        %1466 = vmatprep.subr.mxu0 0.0
        %1467 = vmatpush1.xpose.msra.mxu0 0.0
        %1468 = vmatprep.subr.mxu0 0.0
        %1469 = vmatpush1.xpose.msra.mxu0 0.0
        %1470 = vmatprep.subr.mxu0 0.0
        %1471 = vmatpush1.xpose.msra.mxu0 0.0
        %1472 = vmatprep.subr.mxu0 0.0
        %1473 = vmatpush1.xpose.msra.mxu0 0.0
        %1474 = vmatprep.subr.mxu0 0.0
        %1475 = vmatpush1.xpose.msra.mxu0 0.0
        %1476 = vmatprep.subr.mxu0 0.0
        %1477 = vmatpush1.xpose.msra.mxu0 0.0
        %1478 = vmatprep.subr.mxu0 0.0
        %1479 = vmatpush1.xpose.msra.mxu0 0.0
        %1480 = vmatprep.subr.mxu0 0.0
        %1481 = vmatpush1.xpose.msra.mxu0 0.0
        %1482 = vmatprep.subr.mxu0 0.0
        %1483 = vmatpush1.xpose.msra.mxu0 0.0
        %1484 = vmatprep.subr.mxu0 0.0
        %1485 = vmatpush1.xpose.msra.mxu0 0.0
        %1486 = vmatprep.subr.mxu0 0.0
        %1487 = vmatpush1.xpose.msra.mxu0 0.0
        %1488 = vmatprep.subr.mxu0 0.0
        %1489 = vmatpush1.xpose.msra.mxu0 0.0
        %1490 = vmatprep.subr.mxu0 0.0
        %1491 = vmatpush1.xpose.msra.mxu0 0.0
        %1492 = vmatprep.subr.mxu0 0.0
        %1493 = vmatpush1.xpose.msra.mxu0 0.0
        %1494 = vmatprep.subr.mxu0 0.0
        %1495 = vmatpush1.xpose.msra.mxu0 0.0
        %1496 = vmatprep.mubr.f32.mxu0 0.0
        %1497 = vmatmul.mubr.f32.gmra.mrb[0].mxu0 %v1426
        %v1498 = vpop.f32.mrb[0].mxu0
        %v1499 = vadd.f32 0.0, %v1498
        %v1500 = vpop.f32.mrb[0].mxu0
        %1501 = vdwg.mxu0
        %v1502 = vmul.f32 %v1499, 0.35355338
        %v1503 = vsel %vm982, %v1502, -inf
        %1504 = vmax.xlane.f32.xlu0 %v1503
        %v1505 = vpop.xlane.xlu0 %1504
        %v1506 = vsub.f32 %v1502, %v1505
        %v1507 = vmul.f32 %v1506, 1.442695
        %v1508 = vpow.pop %v1507
        %v1509 = vsel %vm982, %v1508, 0.0
        %1510 = vadd.xlane.f32.xlu0 %v1509
        %v1511 = vpop.xlane.xlu0 %1510
        %v1512 = vrcp.pop %v1511
        %v1513 = vmul.f32 %v1508, %v1512
        %s1514 = scalar_lea.vmem %s626, 24 [#allocation15]
        %1515 = vst.msk [vmem:[%s1514] sm:$0xff] %vm982, %v1513
        %1516 = vrot.lane.b32.xlu0 %v893, 104
        %v1517 = vpop.permute.xlu0 %1516
        %1518 = vrot.lane.b32.xlu0 %v898, 104
        %v1519 = vpop.permute.xlu0 %1518
        %v1523 = vsel %vm982, %v1513, 0
        %1525 = vmatprep.subr.mxu0 0.0
        %1526 = vmatpush1.msra.mxu0 %v1517
        %1527 = vmatprep.subr.mxu0 0.0
        %1528 = vmatpush1.msra.mxu0 %v1519
        %1529 = vmatprep.subr.mxu0 0.0
        %1530 = vmatpush1.msra.mxu0 0.0
        %1531 = vmatprep.subr.mxu0 0.0
        %1532 = vmatpush1.msra.mxu0 0.0
        %1533 = vmatprep.subr.mxu0 0.0
        %1534 = vmatpush1.msra.mxu0 0.0
        %1535 = vmatprep.subr.mxu0 0.0
        %1536 = vmatpush1.msra.mxu0 0.0
        %1537 = vmatprep.subr.mxu0 0.0
        %1538 = vmatpush1.msra.mxu0 0.0
        %1539 = vmatprep.subr.mxu0 0.0
        %1540 = vmatpush1.msra.mxu0 0.0
        %1541 = vmatprep.subr.mxu0 0.0
        %1542 = vmatpush1.msra.mxu0 0.0
        %1543 = vmatprep.subr.mxu0 0.0
        %1544 = vmatpush1.msra.mxu0 0.0
        %1545 = vmatprep.subr.mxu0 0.0
        %1546 = vmatpush1.msra.mxu0 0.0
        %1547 = vmatprep.subr.mxu0 0.0
        %1548 = vmatpush1.msra.mxu0 0.0
        %1549 = vmatprep.subr.mxu0 0.0
        %1550 = vmatpush1.msra.mxu0 0.0
        %1551 = vmatprep.subr.mxu0 0.0
        %1552 = vmatpush1.msra.mxu0 0.0
        %1553 = vmatprep.subr.mxu0 0.0
        %1554 = vmatpush1.msra.mxu0 0.0
        %1555 = vmatprep.subr.mxu0 0.0
        %1556 = vmatpush1.msra.mxu0 0.0
        %1557 = vmatprep.subr.mxu0 0.0
        %1558 = vmatpush1.msra.mxu0 0.0
        %1559 = vmatprep.subr.mxu0 0.0
        %1560 = vmatpush1.msra.mxu0 0.0
        %1561 = vmatprep.subr.mxu0 0.0
        %1562 = vmatpush1.msra.mxu0 0.0
        %1563 = vmatprep.subr.mxu0 0.0
        %1564 = vmatpush1.msra.mxu0 0.0
        %1565 = vmatprep.subr.mxu0 0.0
        %1566 = vmatpush1.msra.mxu0 0.0
        %1567 = vmatprep.subr.mxu0 0.0
        %1568 = vmatpush1.msra.mxu0 0.0
        %1569 = vmatprep.subr.mxu0 0.0
        %1570 = vmatpush1.msra.mxu0 0.0
        %1571 = vmatprep.subr.mxu0 0.0
        %1572 = vmatpush1.msra.mxu0 0.0
        %1573 = vmatprep.subr.mxu0 0.0
        %1574 = vmatpush1.msra.mxu0 0.0
        %1575 = vmatprep.subr.mxu0 0.0
        %1576 = vmatpush1.msra.mxu0 0.0
        %1577 = vmatprep.subr.mxu0 0.0
        %1578 = vmatpush1.msra.mxu0 0.0
        %1579 = vmatprep.subr.mxu0 0.0
        %1580 = vmatpush1.msra.mxu0 0.0
        %1581 = vmatprep.subr.mxu0 0.0
        %1582 = vmatpush1.msra.mxu0 0.0
        %1583 = vmatprep.subr.mxu0 0.0
        %1584 = vmatpush1.msra.mxu0 0.0
        %1585 = vmatprep.subr.mxu0 0.0
        %1586 = vmatpush1.msra.mxu0 0.0
        %1587 = vmatprep.subr.mxu0 0.0
        %1588 = vmatpush1.msra.mxu0 0.0
        %1589 = vmatprep.mubr.f32.mxu0 0.0
        %1590 = vmatmul.mubr.f32.gmra.mrb[0].mxu0 %v1523
        %v1591 = vpop.f32.mrb[0].mxu0
        %v1592 = vadd.f32 0.0, %v1591
        %v1593 = vpop.f32.mrb[0].mxu0
        %1594 = vdwg.mxu0
        %1596 = vrot.lane.b32.xlu0 %v1242, 8
        %v1597 = vpop.permute.xlu0 %1596
        %1600 = vrot.lane.b32.xlu0 %v1417, 16
        %v1601 = vpop.permute.xlu0 %1600
        %1604 = vrot.lane.b32.xlu0 %v1592, 24
        %v1605 = vpop.permute.xlu0 %1604
        %v1607 = vsel %vm901, %v1065, %v1597
        %v1608 = vsel %vm982, %v1607, %v1601
        %vm1609 = vcmask 195584
        %v1610 = vsel %vm1609, %v1608, %v1605
        %v1611 = vadd.f32 %v1610, %v627
        %v1612 = vsel %vm643, %v1611, 0.0
        %1613 = vadd.xlane.f32.xlu0 %v1612
        %v1614 = vpop.xlane.xlu0 %1613
        %v1615 = vrcp.pop 32.0
        %v1616 = vmul.f32 %v1614, %v1615
        %v1617 = vsub.f32 %v1611, %v1616
        %v1618 = vmul.f32 %v1617, %v1617
        %v1619 = vsel %vm643, %v1618, 0.0
        %1620 = vadd.xlane.f32.xlu0 %v1619
        %v1621 = vpop.xlane.xlu0 %1620
        %v1622 = vmul.f32 %v1621, %v1615
        %v1623 = vadd.f32 %v1622, 1e-05
        %v1624 = vrsqrt.pop %v1623
        %v1625 = vmul.f32 %v1617, %v1624
        %v1626 = vld [vmem:[%s11] sm:$0x1]
        %v1628 = vlaneseq
        %v1629 = vshrl.u32 %v1628, 7
        %v1630 = vsub.s32 0, %v1629
        %v1631 = vrot.slane %v1626, %v1630
        %v1633 = vmul.f32 %v1625, %v1631
        %v1634 = vld [vmem:[%s12] sm:$0x1]
        %v1636 = vlaneseq
        %v1637 = vshrl.u32 %v1636, 7
        %v1638 = vsub.s32 0, %v1637
        %v1639 = vrot.slane %v1634, %v1638
        %v1641 = vadd.f32 %v1633, %v1639
        %v1642 = vld [vmem:[%s9] sm:$0xff]
        %v1643 = vld [vmem:[%s9 + $0x8] sm:$0xff]
        %v1644 = vld [vmem:[%s9 + $0x10] sm:$0xff]
        %v1645 = vld [vmem:[%s9 + $0x18] sm:$0xff]
        %v1646 = vld [vmem:[%s10] sm:$0x1]
        %v1648 = vlaneseq
        %v1649 = vshrl.u32 %v1648, 7
        %v1650 = vsub.s32 0, %v1649
        %v1651 = vrot.slane %v1646, %v1650
        %v1654 = vsel %vm643, %v1641, 0
        %1656 = vmatprep.subr.mxu0 0.0
        %1657 = vmatpush1.msra.mxu0 %v1642
        %1658 = vmatprep.subr.mxu0 0.0
        %1659 = vmatpush1.msra.mxu0 %v1643
        %1660 = vmatprep.subr.mxu0 0.0
        %1661 = vmatpush1.msra.mxu0 %v1644
        %1662 = vmatprep.subr.mxu0 0.0
        %1663 = vmatpush1.msra.mxu0 %v1645
        %1664 = vmatprep.subr.mxu0 0.0
        %1665 = vmatpush1.msra.mxu0 0.0
        %1666 = vmatprep.subr.mxu0 0.0
        %1667 = vmatpush1.msra.mxu0 0.0
        %1668 = vmatprep.subr.mxu0 0.0
        %1669 = vmatpush1.msra.mxu0 0.0
        %1670 = vmatprep.subr.mxu0 0.0
        %1671 = vmatpush1.msra.mxu0 0.0
        %1672 = vmatprep.subr.mxu0 0.0
        %1673 = vmatpush1.msra.mxu0 0.0
        %1674 = vmatprep.subr.mxu0 0.0
        %1675 = vmatpush1.msra.mxu0 0.0
        %1676 = vmatprep.subr.mxu0 0.0
        %1677 = vmatpush1.msra.mxu0 0.0
        %1678 = vmatprep.subr.mxu0 0.0
        %1679 = vmatpush1.msra.mxu0 0.0
        %1680 = vmatprep.subr.mxu0 0.0
        %1681 = vmatpush1.msra.mxu0 0.0
        %1682 = vmatprep.subr.mxu0 0.0
        %1683 = vmatpush1.msra.mxu0 0.0
        %1684 = vmatprep.subr.mxu0 0.0
        %1685 = vmatpush1.msra.mxu0 0.0
        %1686 = vmatprep.subr.mxu0 0.0
        %1687 = vmatpush1.msra.mxu0 0.0
        %1688 = vmatprep.subr.mxu0 0.0
        %1689 = vmatpush1.msra.mxu0 0.0
        %1690 = vmatprep.subr.mxu0 0.0
        %1691 = vmatpush1.msra.mxu0 0.0
        %1692 = vmatprep.subr.mxu0 0.0
        %1693 = vmatpush1.msra.mxu0 0.0
        %1694 = vmatprep.subr.mxu0 0.0
        %1695 = vmatpush1.msra.mxu0 0.0
        %1696 = vmatprep.subr.mxu0 0.0
        %1697 = vmatpush1.msra.mxu0 0.0
        %1698 = vmatprep.subr.mxu0 0.0
        %1699 = vmatpush1.msra.mxu0 0.0
        %1700 = vmatprep.subr.mxu0 0.0
        %1701 = vmatpush1.msra.mxu0 0.0
        %1702 = vmatprep.subr.mxu0 0.0
        %1703 = vmatpush1.msra.mxu0 0.0
        %1704 = vmatprep.subr.mxu0 0.0
        %1705 = vmatpush1.msra.mxu0 0.0
        %1706 = vmatprep.subr.mxu0 0.0
        %1707 = vmatpush1.msra.mxu0 0.0
        %1708 = vmatprep.subr.mxu0 0.0
        %1709 = vmatpush1.msra.mxu0 0.0
        %1710 = vmatprep.subr.mxu0 0.0
        %1711 = vmatpush1.msra.mxu0 0.0
        %1712 = vmatprep.subr.mxu0 0.0
        %1713 = vmatpush1.msra.mxu0 0.0
        %1714 = vmatprep.subr.mxu0 0.0
        %1715 = vmatpush1.msra.mxu0 0.0
        %1716 = vmatprep.subr.mxu0 0.0
        %1717 = vmatpush1.msra.mxu0 0.0
        %1718 = vmatprep.subr.mxu0 0.0
        %1719 = vmatpush1.msra.mxu0 0.0
        %1720 = vmatprep.mubr.f32.mxu0 0.0
        %1721 = vmatmul.mubr.f32.gmra.mrb[0].mxu0 %v1654
        %v1722 = vpop.f32.mrb[0].mxu0
        %v1723 = vadd.f32 %v1651, %v1722
        %v1724 = vpop.f32.mrb[0].mxu0
        %1725 = vdwg.mxu0
        %1726 = vst.msk [vmem:[%s619] sm:$0xff] %vm643, %v1723
        %s1727 = sand.u32 %s336, 1
        %s1728 = scalar_lea.sflag [#allocation4], %s1727
        %s1729 = sand.u32 %s336, 1
        %s1730 = smul.addr %s1729, 8
        %s1731 = scalar_lea.vmem [#allocation14], %s1730
        %s1732 = sand.u32 %s362, 1
        %s1733 = scalar_lea.sflag [#allocation16], %s1732
        %s1734 = sand.u32 %s362, 1
        %s1735 = smul.addr %s1734, 32
        %s1736 = scalar_lea.vmem [#allocation15], %s1735
        // Predicated region
        $region101: #{tpu_custom_call.1} parent=71 // pred_check
          %p1737 = pneg %p346
        $region102: #{tpu_custom_call.1} parent=71 // pred_check_branch
          %1739 = sbr.rel (%p1737) target = $region104
        $region103: #{tpu_custom_call.1} parent=71 // pred_region
          %s1741 = ssub.s32 128, 128
          %1742 = vsyncadd %s1728, %s1741
          %s1743 = smul.addr %s40, 128
          %s1744 = scalar_lea.hbm %s13, %s1743
          %s1746 = sshll.u32 %s1731, 4
          %s1747 = int_to_ptr.vmem [resolvable:$true] %s1746
          %1749 = dma.vmem_to_hbm [thread:$0]  %s1747, 128, %s1744, %s1728
        $region104: #{tpu_custom_call.1} parent=71 // pred_fallthru
          _
        // Predicated region
        $region105: #{tpu_custom_call.1} parent=71 // pred_check
          %p1750 = pneg %p372
        $region106: #{tpu_custom_call.1} parent=71 // pred_check_branch
          %1752 = sbr.rel (%p1750) target = $region108
        $region107: #{tpu_custom_call.1} parent=71 // pred_region
          %s1754 = ssub.s32 512, 512
          %1755 = vsyncadd %s1733, %s1754
          %s1756 = smul.addr %s40, 4
          %s1757 = smul.addr %s1756, 128
          %s1758 = scalar_lea.hbm %s14, %s1757
          %s1759 = sshll.u32 %s1736, 4
          %s1760 = int_to_ptr.vmem [resolvable:$true] %s1759
          %1765 = dma.vmem_to_hbm [thread:$0]  %s1760, 512, %s1758, %s1733, 128, 128, 8
        $region108: #{tpu_custom_call.1} parent=71 // pred_fallthru
          _
      $region72: #{tpu_custom_call.1} parent=5 // pred_fallthru
        _
      %p1766 = scmp.le.s32.totalorder 2, %s35
      // Predicated region
      $region109: #{tpu_custom_call.1} parent=5 // pred_check
        %p1767 = pneg %p1766
      $region110: #{tpu_custom_call.1} parent=5 // pred_check_branch
        %1769 = sbr.rel (%p1767) target = $region112
      $region111: #{tpu_custom_call.1} parent=5 // pred_region
        %s1770 = ssub.s32 %s35, 2
        // Predicated region
        $region113: #{tpu_custom_call.1} parent=111 // pred_check
          %p1771 = pneg %p352
        $region114: #{tpu_custom_call.1} parent=111 // pred_check_branch
          %1773 = sbr.rel (%p1771) target = $region116
        $region115: #{tpu_custom_call.1} parent=111 // pred_region
          %s1774 = sand.u32 %s337, 1
          %s1775 = scalar_lea.sflag [#allocation4], %s1774
          %s1776 = sand.u32 %s337, 1
          %s1777 = smul.addr %s1776, 8
          %s1778 = scalar_lea.vmem [#allocation14], %s1777
          %1779 = dma.done %s1775, 128
        $region116: #{tpu_custom_call.1} parent=111 // pred_fallthru
          _
        // Predicated region
        $region117: #{tpu_custom_call.1} parent=111 // pred_check
          %p1780 = pneg %p378
        $region118: #{tpu_custom_call.1} parent=111 // pred_check_branch
          %1782 = sbr.rel (%p1780) target = $region120
        $region119: #{tpu_custom_call.1} parent=111 // pred_region
          %s1783 = sand.u32 %s363, 1
          %s1784 = scalar_lea.sflag [#allocation16], %s1783
          %s1785 = sand.u32 %s363, 1
          %s1786 = smul.addr %s1785, 32
          %s1787 = scalar_lea.vmem [#allocation15], %s1786
          %1788 = dma.done %s1784, 512
        $region120: #{tpu_custom_call.1} parent=111 // pred_fallthru
          _
      $region112: #{tpu_custom_call.1} parent=5 // pred_fallthru
        _
    $region6: #{tpu_custom_call.1} parent=1 // loop_footer
      %s39 = sadd.s32 1, %s35
    $region7: #{tpu_custom_call.1} parent=1 // loop_footer_branch
      %34 = sbr.rel target = $region3
    $region8: #{tpu_custom_call.1} parent=1 // loop_exit
      _
    %1789 = vsyncpa [#allocation3], 1
    %s1790 = scalar_lea.sflag [#allocation3], 1
    %1791 = vsyncpa %s1790, 1
    %1792 = vsyncpa [#allocation6], 1
    %s1793 = scalar_lea.sflag [#allocation6], 1
    %1794 = vsyncpa %s1793, 1
    %1795 = vsyncpa [#allocation9], 1
    %1796 = vsyncpa [#allocation12], 1
    %1797 = vsyncpa [#allocation4], 1
    %s1798 = scalar_lea.sflag [#allocation4], 1
    %1799 = vsyncpa %s1798, 1
    %1800 = vsyncpa [#allocation16], 1
    %s1801 = scalar_lea.sflag [#allocation16], 1
    %1802 = vsyncpa %s1801, 1

</llo_original>
